<compile_context>
chip_gen: v7x
topology: tpu7x:2x2x1
jax: 0.10.0
libtpu: 0.0.40
codegen_flags: <defaults>
</compile_context>

<pallas_src>
import random

import numpy as np
import jax
import jax.numpy as jnp
from jax import lax
from jax.experimental import pallas as pl
from jax.experimental.pallas import tpu as pltpu


# ----------------------------- trace-time helpers -----------------------------

def _gaussian_kernel1d(kernel_size: int, sigma: float):
    """torchvision._get_gaussian_kernel1d, as Python floats (baked immediates)."""
    half = (kernel_size - 1) * 0.5
    xs = np.linspace(-half, half, kernel_size)
    pdf = np.exp(-0.5 * (xs / sigma) ** 2)
    k1d = pdf / pdf.sum()
    return [float(v) for v in k1d]


def _reflect_index(i: int, n: int) -> int:
    """'reflect' (edge not repeated) index folding; valid because pad < n."""
    if i < 0:
        return -i
    if i > n - 1:
        return 2 * (n - 1) - i
    return i


def _reflect_band_matrix(n: int, w1d, pad: int) -> np.ndarray:
    """(n, n) matrix B with  out[..., c] = sum_s v[..., s] * B[s, c]  equal to a
    1-D Gaussian blur with reflect padding along the last axis."""
    B = np.zeros((n, n), dtype=np.float64)
    for c in range(n):
        for t in range(len(w1d)):
            B[_reflect_index(c + t - pad, n), c] += w1d[t]
    return B.astype(np.float32)


def _folded_row_weights(r: int, h: int, w1d, pad: int):
    """Vertical tap weights for output row r with reflection folded in:
    [(source_row, weight), ...], every source row inside [0, h)."""
    fw = {}
    for t in range(len(w1d)):
        idx = _reflect_index(r + t - pad, h)
        fw[idx] = fw.get(idx, 0.0) + w1d[t]
    return sorted(fw.items())


def _choose_channel_block(nc: int, h: int, w: int, itemsize: int,
                          target_bytes: int = 4 << 20,
                          max_cblk_times_w: int = 2048) -> int:
    """Largest divisor of nc such that the (cblk, H, W) block stays under
    target_bytes (4 MiB: v7x-safe with double-buffered in+out blocks) and the
    fused 8-row strip (cblk*8*W f32 accumulator + one tap term) stays well
    inside the 64 x 4 KiB vreg file.  Keeps >= 2 grid steps and prefers an
    even step count (v7x has two TensorCores per chip)."""
    per_ch = max(1, h * w * itemsize)
    cap = max(1, max_cblk_times_w // max(1, w))
    divs = [c for c in range(1, nc + 1)
            if nc % c == 0 and c * per_ch <= target_bytes and c <= cap]
    if not divs:
        return 1
    best = max(divs)
    if best == nc and nc > 1:                       # keep >= 2 grid steps
        smaller = [c for c in divs if c < nc]
        if smaller:
            best = max(smaller)
    even = [c for c in divs if c <= best and 2 * c >= best and (nc // c) % 2 == 0]
    if even:                                        # prefer even step counts
        best = max(even)
    return best


# --------------------------------- the kernel ---------------------------------

def _make_blur_kernel(H, W, k, pad, w1d, rows_per_strip, use_matmul):

    def run(x_ref, o_ref, hpass):
        # ---- image-boundary output rows: vertical reflection folded into
        # per-row weights (no padded copy, no masked pad-row writes) ----
        top = list(range(min(pad, H)))
        bot = list(range(max(pad, H - pad), H))
        for r in top + bot:
            acc = None
            for src, wt in _folded_row_weights(r, H, w1d, pad):
                term = wt * x_ref[:, src:src + 1, :].astype(jnp.float32)
                acc = term if acc is None else acc + term
            o_ref[:, r:r + 1, :] = hpass(acc).astype(o_ref.dtype)

        # ---- interior rows: strip-fused separable blur; every vertical tap is
        # an in-bounds ref-slice load straight from x_ref ----
        r = pad
        r_end = H - pad
        while r < r_end:
            # Align strip ends to 8-row sublane groups where possible.
            rows = min(rows_per_strip - (r % rows_per_strip), r_end - r)
            acc = w1d[0] * x_ref[:, r - pad:r - pad + rows, :].astype(jnp.float32)
            for t in range(1, k):
                lo = r - pad + t
                acc = acc + w1d[t] * x_ref[:, lo:lo + rows, :].astype(jnp.float32)
            o_ref[:, r:r + rows, :] = hpass(acc).astype(o_ref.dtype)
            r += rows

    if use_matmul:
        def kernel(x_ref, b_ref, o_ref):
            cblk = x_ref.shape[0]
            # Hoisted once per grid step.  Reflection is baked into the band
            # matrix, so the horizontal pass needs no boundary handling.
            bmat3 = jnp.broadcast_to(b_ref[...], (cblk, W, W))

            def hpass(v):                     # v: (cblk, rows, W) f32
                return jnp.einsum("brs,bsc->brc", v, bmat3,
                                  preferred_element_type=jnp.float32)

            run(x_ref, o_ref, hpass)
        return kernel

    def hpass_roll(v):                        # large-W path: XLU rolls + edge fixes
        out = w1d[pad] * v
        lane = lax.broadcasted_iota(jnp.int32, v.shape, 2)
        for d in range(1, pad + 1):
            yp = pltpu.roll(v, (W - d) % W, 2)     # yp[..., c] = v[..., c + d (mod W)]
            for c in range(W - d, W):
                src = 2 * (W - 1) - (c + d)
                yp = jnp.where(lane == c,
                               jnp.broadcast_to(v[:, :, src:src + 1], v.shape), yp)
            ym = pltpu.roll(v, d, 2)               # ym[..., c] = v[..., c - d (mod W)]
            for c in range(d):
                src = d - c
                ym = jnp.where(lane == c,
                               jnp.broadcast_to(v[:, :, src:src + 1], v.shape), ym)
            out = out + w1d[pad + d] * yp + w1d[pad - d] * ym
        return out

    def kernel(x_ref, o_ref):
        run(x_ref, o_ref, hpass_roll)
    return kernel


def gaussian_blur_pallas(x: jnp.ndarray, kernel_size: int = 5, sigma: float = 1.0):
    """Depthwise Gaussian blur with torchvision TF.gaussian_blur semantics."""
    N, C, H, W = x.shape
    k = int(kernel_size)
    pad = k // 2
    assert k % 2 == 1, "kernel_size must be odd"
    assert H > pad and W > pad, "reflect padding needs H, W > kernel_size // 2"

    w1d = _gaussian_kernel1d(k, float(sigma))       # Python floats -> immediates
    NC = N * C
    x2 = x.reshape(NC, H, W)                        # free reshape, fuse N and C

    cblk = _choose_channel_block(NC, H, W, x.dtype.itemsize)
    grid = (NC // cblk,)
    rows_per_strip = 8                              # one f32 sublane group

    # Horizontal operator: reflect-folded band matmul on the (otherwise idle)
    # MXU for small/medium W; pltpu.roll taps for large W where an O(W^2)
    # matrix would waste VMEM and FLOPs.
    use_matmul = W <= 256

    kernel = _make_blur_kernel(H, W, k, pad, w1d, rows_per_strip, use_matmul)

    in_specs = [pl.BlockSpec((cblk, H, W), lambda i: (i, 0, 0))]
    operands = [x2]
    if use_matmul:
        in_specs.append(pl.BlockSpec((W, W), lambda i: (0, 0)))
        operands.append(jnp.asarray(_reflect_band_matrix(W, w1d, pad)))

    out = pl.pallas_call(
        kernel,
        out_shape=jax.ShapeDtypeStruct((NC, H, W), x.dtype),
        grid=grid,
        in_specs=in_specs,
        out_specs=pl.BlockSpec((cblk, H, W), lambda i: (i, 0, 0)),
        compiler_params=pltpu.CompilerParams(
            dimension_semantics=("parallel",),
            # Blocks are <= ~4 MiB; 48 MiB keeps double-buffering headroom on
            # every generation (v7x has 64 MiB physical VMEM per TensorCore,
            # v5e/v6e have 128 MiB).
            vmem_limit_bytes=48 * 1024 * 1024,
        ),
    )(*operands)
    return out.reshape(N, C, H, W)


# ------------------------------ pure-JAX reference ------------------------------

def gaussian_blur_ref(x: jnp.ndarray, kernel_size: int = 5, sigma: float = 1.0):
    """Separable reflect-padded Gaussian blur in f32 (elementwise ops only, so
    no TPU matmul-precision ambiguity); matches torchvision TF.gaussian_blur."""
    N, C, H, W = x.shape
    pad = kernel_size // 2
    k1d = _gaussian_kernel1d(kernel_size, float(sigma))
    xp = jnp.pad(x.astype(jnp.float32),
                 ((0, 0), (0, 0), (pad, pad), (pad, pad)), mode="reflect")
    v = sum(k1d[t] * xp[:, :, t:t + H, :] for t in range(kernel_size))
    o = sum(k1d[t] * v[:, :, :, t:t + W] for t in range(kernel_size))
    return o.astype(x.dtype)


if __name__ == "__main__":
    # GaussianBlur.forward(): sigma = random.uniform(0.1, 2.0) is a host-side
    # Python draw (baked into the kernel weights at trace time); seeded here.
    random.seed(0)
    sigma = random.uniform(0.1, 2.0)

    x = jax.random.normal(jax.random.PRNGKey(0), (2, 4, 16, 16), dtype=jnp.float32)

    out = gaussian_blur_pallas(x, kernel_size=5, sigma=sigma)
    out = jax.block_until_ready(out)

    ref = gaussian_blur_ref(x, kernel_size=5, sigma=sigma)
    assert out.shape == (2, 4, 16, 16) and out.dtype == x.dtype
    max_err = jnp.max(jnp.abs(out.astype(jnp.float32) - ref.astype(jnp.float32)))
    assert jnp.allclose(out, ref, atol=1e-4, rtol=1e-4), float(max_err)

    print("KERNEL_OK")
</pallas_src>

<mosaic_0001>
module attributes {stable_mosaic.version = 11 : i64} {
  func.func @kernel(%arg0: i32, %arg1: memref<4x16x16xf32, #tpu.memory_space<vmem>>, %arg2: memref<16x16xf32, #tpu.memory_space<vmem>>, %arg3: memref<4x16x16xf32, #tpu.memory_space<vmem>>) attributes {dimension_semantics = [#tpu.dimension_semantics<parallel>], iteration_bounds = array<i64: 2>, scalar_prefetch = 0 : i64, scratch_operands = 0 : i64, tpu.core_type = #tpu.core_type<tc>, window_params = [{transform_indices = @transform_0, window_bounds = array<i64: 4, 16, 16>}, {pipeline_mode = #tpu.pipeline_mode<synchronous>, transform_indices = @transform_1, window_bounds = array<i64: 16, 16>}, {transform_indices = @transform_2, window_bounds = array<i64: 4, 16, 16>}]} {
    %c0 = arith.constant 0 : index
    %c0_0 = arith.constant 0 : index
    %0 = vector.load %arg2[%c0, %c0_0] : memref<16x16xf32, #tpu.memory_space<vmem>>, vector<16x16xf32>
    %1 = vector.shape_cast %0 : vector<16x16xf32> to vector<1x16x16xf32>
    %2 = vector.broadcast %1 : vector<1x16x16xf32> to vector<4x16x16xf32>
    %c0_1 = arith.constant 0 : index
    %c0_2 = arith.constant 0 : index
    %c0_3 = arith.constant 0 : index
    %3 = vector.load %arg1[%c0_1, %c0_2, %c0_3] : memref<4x16x16xf32, #tpu.memory_space<vmem>>, vector<4x1x16xf32>
    %cst = arith.constant 0.271116883 : f32
    %4 = vector.broadcast %cst : f32 to vector<4x1x16xf32>
    %5 = arith.mulf %4, %3 : vector<4x1x16xf32>
    %c0_4 = arith.constant 0 : index
    %c1 = arith.constant 1 : index
    %c0_5 = arith.constant 0 : index
    %6 = vector.load %arg1[%c0_4, %c1, %c0_5] : memref<4x16x16xf32, #tpu.memory_space<vmem>>, vector<4x1x16xf32>
    %cst_6 = arith.constant 0.456495702 : f32
    %7 = vector.broadcast %cst_6 : f32 to vector<4x1x16xf32>
    %8 = arith.mulf %7, %6 : vector<4x1x16xf32>
    %9 = arith.addf %5, %8 : vector<4x1x16xf32>
    %c0_7 = arith.constant 0 : index
    %c2 = arith.constant 2 : index
    %c0_8 = arith.constant 0 : index
    %10 = vector.load %arg1[%c0_7, %c2, %c0_8] : memref<4x16x16xf32, #tpu.memory_space<vmem>>, vector<4x1x16xf32>
    %cst_9 = arith.constant 0.272387415 : f32
    %11 = vector.broadcast %cst_9 : f32 to vector<4x1x16xf32>
    %12 = arith.mulf %11, %10 : vector<4x1x16xf32>
    %13 = arith.addf %9, %12 : vector<4x1x16xf32>
    "tpu.trace_start"() <{level = 10 : i32, message = "brs,bsc->brc"}> : () -> ()
    %cst_10 = arith.constant dense<0.000000e+00> : vector<4x1x16xf32>
    %14 = tpu.matmul %13, %2, %cst_10 {dimension_numbers = #tpu.dot_dimension_numbers<[2], [1], [1], [2], [0, 0, 0, 1, 1, 2], [0], [0]>} : vector<4x1x16xf32>, vector<4x16x16xf32>, vector<4x1x16xf32> -> vector<4x1x16xf32>
    "tpu.trace_stop"() : () -> ()
    %c0_11 = arith.constant 0 : index
    %c0_12 = arith.constant 0 : index
    %c0_13 = arith.constant 0 : index
    %15 = vector.load %arg3[%c0_11, %c0_12, %c0_13] : memref<4x16x16xf32, #tpu.memory_space<vmem>>, vector<4x1x16xf32>
    tpu.vector_store %arg3[%c0_11, %c0_12, %c0_13], %14 {strides = array<i32>} : memref<4x16x16xf32, #tpu.memory_space<vmem>>, vector<4x1x16xf32>,
    %c0_14 = arith.constant 0 : index
    %c0_15 = arith.constant 0 : index
    %c0_16 = arith.constant 0 : index
    %16 = vector.load %arg1[%c0_14, %c0_15, %c0_16] : memref<4x16x16xf32, #tpu.memory_space<vmem>>, vector<4x1x16xf32>
    %cst_17 = arith.constant 0.228247851 : f32
    %17 = vector.broadcast %cst_17 : f32 to vector<4x1x16xf32>
    %18 = arith.mulf %17, %16 : vector<4x1x16xf32>
    %c0_18 = arith.constant 0 : index
    %c1_19 = arith.constant 1 : index
    %c0_20 = arith.constant 0 : index
    %19 = vector.load %arg1[%c0_18, %c1_19, %c0_20] : memref<4x16x16xf32, #tpu.memory_space<vmem>>, vector<4x1x16xf32>
    %cst_21 = arith.constant 0.407310605 : f32
    %20 = vector.broadcast %cst_21 : f32 to vector<4x1x16xf32>
    %21 = arith.mulf %20, %19 : vector<4x1x16xf32>
    %22 = arith.addf %18, %21 : vector<4x1x16xf32>
    %c0_22 = arith.constant 0 : index
    %c2_23 = arith.constant 2 : index
    %c0_24 = arith.constant 0 : index
    %23 = vector.load %arg1[%c0_22, %c2_23, %c0_24] : memref<4x16x16xf32, #tpu.memory_space<vmem>>, vector<4x1x16xf32>
    %cst_25 = arith.constant 0.228247851 : f32
    %24 = vector.broadcast %cst_25 : f32 to vector<4x1x16xf32>
    %25 = arith.mulf %24, %23 : vector<4x1x16xf32>
    %26 = arith.addf %22, %25 : vector<4x1x16xf32>
    %c0_26 = arith.constant 0 : index
    %c3 = arith.constant 3 : index
    %c0_27 = arith.constant 0 : index
    %27 = vector.load %arg1[%c0_26, %c3, %c0_27] : memref<4x16x16xf32, #tpu.memory_space<vmem>>, vector<4x1x16xf32>
    %cst_28 = arith.constant 0.136193708 : f32
    %28 = vector.broadcast %cst_28 : f32 to vector<4x1x16xf32>
    %29 = arith.mulf %28, %27 : vector<4x1x16xf32>
    %30 = arith.addf %26, %29 : vector<4x1x16xf32>
    "tpu.trace_start"() <{level = 10 : i32, message = "brs,bsc->brc"}> : () -> ()
    %cst_29 = arith.constant dense<0.000000e+00> : vector<4x1x16xf32>
    %31 = tpu.matmul %30, %2, %cst_29 {dimension_numbers = #tpu.dot_dimension_numbers<[2], [1], [1], [2], [0, 0, 0, 1, 1, 2], [0], [0]>} : vector<4x1x16xf32>, vector<4x16x16xf32>, vector<4x1x16xf32> -> vector<4x1x16xf32>
    "tpu.trace_stop"() : () -> ()
    %c0_30 = arith.constant 0 : index
    %c1_31 = arith.constant 1 : index
    %c0_32 = arith.constant 0 : index
    %32 = vector.load %arg3[%c0_30, %c1_31, %c0_32] : memref<4x16x16xf32, #tpu.memory_space<vmem>>, vector<4x1x16xf32>
    tpu.vector_store %arg3[%c0_30, %c1_31, %c0_32], %31 {strides = array<i32>} : memref<4x16x16xf32, #tpu.memory_space<vmem>>, vector<4x1x16xf32>,
    %c0_33 = arith.constant 0 : index
    %c12 = arith.constant 12 : index
    %c0_34 = arith.constant 0 : index
    %33 = vector.load %arg1[%c0_33, %c12, %c0_34] : memref<4x16x16xf32, #tpu.memory_space<vmem>>, vector<4x1x16xf32>
    %cst_35 = arith.constant 0.136193708 : f32
    %34 = vector.broadcast %cst_35 : f32 to vector<4x1x16xf32>
    %35 = arith.mulf %34, %33 : vector<4x1x16xf32>
    %c0_36 = arith.constant 0 : index
    %c13 = arith.constant 13 : index
    %c0_37 = arith.constant 0 : index
    %36 = vector.load %arg1[%c0_36, %c13, %c0_37] : memref<4x16x16xf32, #tpu.memory_space<vmem>>, vector<4x1x16xf32>
    %cst_38 = arith.constant 0.228247851 : f32
    %37 = vector.broadcast %cst_38 : f32 to vector<4x1x16xf32>
    %38 = arith.mulf %37, %36 : vector<4x1x16xf32>
    %39 = arith.addf %35, %38 : vector<4x1x16xf32>
    %c0_39 = arith.constant 0 : index
    %c14 = arith.constant 14 : index
    %c0_40 = arith.constant 0 : index
    %40 = vector.load %arg1[%c0_39, %c14, %c0_40] : memref<4x16x16xf32, #tpu.memory_space<vmem>>, vector<4x1x16xf32>
    %cst_41 = arith.constant 0.407310605 : f32
    %41 = vector.broadcast %cst_41 : f32 to vector<4x1x16xf32>
    %42 = arith.mulf %41, %40 : vector<4x1x16xf32>
    %43 = arith.addf %39, %42 : vector<4x1x16xf32>
    %c0_42 = arith.constant 0 : index
    %c15 = arith.constant 15 : index
    %c0_43 = arith.constant 0 : index
    %44 = vector.load %arg1[%c0_42, %c15, %c0_43] : memref<4x16x16xf32, #tpu.memory_space<vmem>>, vector<4x1x16xf32>
    %cst_44 = arith.constant 0.228247851 : f32
    %45 = vector.broadcast %cst_44 : f32 to vector<4x1x16xf32>
    %46 = arith.mulf %45, %44 : vector<4x1x16xf32>
    %47 = arith.addf %43, %46 : vector<4x1x16xf32>
    "tpu.trace_start"() <{level = 10 : i32, message = "brs,bsc->brc"}> : () -> ()
    %cst_45 = arith.constant dense<0.000000e+00> : vector<4x1x16xf32>
    %48 = tpu.matmul %47, %2, %cst_45 {dimension_numbers = #tpu.dot_dimension_numbers<[2], [1], [1], [2], [0, 0, 0, 1, 1, 2], [0], [0]>} : vector<4x1x16xf32>, vector<4x16x16xf32>, vector<4x1x16xf32> -> vector<4x1x16xf32>
    "tpu.trace_stop"() : () -> ()
    %c0_46 = arith.constant 0 : index
    %c14_47 = arith.constant 14 : index
    %c0_48 = arith.constant 0 : index
    %49 = vector.load %arg3[%c0_46, %c14_47, %c0_48] : memref<4x16x16xf32, #tpu.memory_space<vmem>>, vector<4x1x16xf32>
    tpu.vector_store %arg3[%c0_46, %c14_47, %c0_48], %48 {strides = array<i32>} : memref<4x16x16xf32, #tpu.memory_space<vmem>>, vector<4x1x16xf32>,
    %c0_49 = arith.constant 0 : index
    %c13_50 = arith.constant 13 : index
    %c0_51 = arith.constant 0 : index
    %50 = vector.load %arg1[%c0_49, %c13_50, %c0_51] : memref<4x16x16xf32, #tpu.memory_space<vmem>>, vector<4x1x16xf32>
    %cst_52 = arith.constant 0.272387415 : f32
    %51 = vector.broadcast %cst_52 : f32 to vector<4x1x16xf32>
    %52 = arith.mulf %51, %50 : vector<4x1x16xf32>
    %c0_53 = arith.constant 0 : index
    %c14_54 = arith.constant 14 : index
    %c0_55 = arith.constant 0 : index
    %53 = vector.load %arg1[%c0_53, %c14_54, %c0_55] : memref<4x16x16xf32, #tpu.memory_space<vmem>>, vector<4x1x16xf32>
    %cst_56 = arith.constant 0.456495702 : f32
    %54 = vector.broadcast %cst_56 : f32 to vector<4x1x16xf32>
    %55 = arith.mulf %54, %53 : vector<4x1x16xf32>
    %56 = arith.addf %52, %55 : vector<4x1x16xf32>
    %c0_57 = arith.constant 0 : index
    %c15_58 = arith.constant 15 : index
    %c0_59 = arith.constant 0 : index
    %57 = vector.load %arg1[%c0_57, %c15_58, %c0_59] : memref<4x16x16xf32, #tpu.memory_space<vmem>>, vector<4x1x16xf32>
    %cst_60 = arith.constant 0.271116883 : f32
    %58 = vector.broadcast %cst_60 : f32 to vector<4x1x16xf32>
    %59 = arith.mulf %58, %57 : vector<4x1x16xf32>
    %60 = arith.addf %56, %59 : vector<4x1x16xf32>
    "tpu.trace_start"() <{level = 10 : i32, message = "brs,bsc->brc"}> : () -> ()
    %cst_61 = arith.constant dense<0.000000e+00> : vector<4x1x16xf32>
    %61 = tpu.matmul %60, %2, %cst_61 {dimension_numbers = #tpu.dot_dimension_numbers<[2], [1], [1], [2], [0, 0, 0, 1, 1, 2], [0], [0]>} : vector<4x1x16xf32>, vector<4x16x16xf32>, vector<4x1x16xf32> -> vector<4x1x16xf32>
    "tpu.trace_stop"() : () -> ()
    %c0_62 = arith.constant 0 : index
    %c15_63 = arith.constant 15 : index
    %c0_64 = arith.constant 0 : index
    %62 = vector.load %arg3[%c0_62, %c15_63, %c0_64] : memref<4x16x16xf32, #tpu.memory_space<vmem>>, vector<4x1x16xf32>
    tpu.vector_store %arg3[%c0_62, %c15_63, %c0_64], %61 {strides = array<i32>} : memref<4x16x16xf32, #tpu.memory_space<vmem>>, vector<4x1x16xf32>,
    %c0_65 = arith.constant 0 : index
    %c0_66 = arith.constant 0 : index
    %c0_67 = arith.constant 0 : index
    %63 = vector.load %arg1[%c0_65, %c0_66, %c0_67] : memref<4x16x16xf32, #tpu.memory_space<vmem>>, vector<4x6x16xf32>
    %cst_68 = arith.constant 0.136193708 : f32
    %64 = vector.broadcast %cst_68 : f32 to vector<4x6x16xf32>
    %65 = arith.mulf %64, %63 : vector<4x6x16xf32>
    %c0_69 = arith.constant 0 : index
    %c1_70 = arith.constant 1 : index
    %c0_71 = arith.constant 0 : index
    %66 = vector.load %arg1[%c0_69, %c1_70, %c0_71] : memref<4x16x16xf32, #tpu.memory_space<vmem>>, vector<4x6x16xf32>
    %cst_72 = arith.constant 0.228247851 : f32
    %67 = vector.broadcast %cst_72 : f32 to vector<4x6x16xf32>
    %68 = arith.mulf %67, %66 : vector<4x6x16xf32>
    %69 = arith.addf %65, %68 : vector<4x6x16xf32>
    %c0_73 = arith.constant 0 : index
    %c2_74 = arith.constant 2 : index
    %c0_75 = arith.constant 0 : index
    %70 = vector.load %arg1[%c0_73, %c2_74, %c0_75] : memref<4x16x16xf32, #tpu.memory_space<vmem>>, vector<4x6x16xf32>
    %cst_76 = arith.constant 0.271116883 : f32
    %71 = vector.broadcast %cst_76 : f32 to vector<4x6x16xf32>
    %72 = arith.mulf %71, %70 : vector<4x6x16xf32>
    %73 = arith.addf %69, %72 : vector<4x6x16xf32>
    %c0_77 = arith.constant 0 : index
    %c3_78 = arith.constant 3 : index
    %c0_79 = arith.constant 0 : index
    %74 = vector.load %arg1[%c0_77, %c3_78, %c0_79] : memref<4x16x16xf32, #tpu.memory_space<vmem>>, vector<4x6x16xf32>
    %cst_80 = arith.constant 0.228247851 : f32
    %75 = vector.broadcast %cst_80 : f32 to vector<4x6x16xf32>
    %76 = arith.mulf %75, %74 : vector<4x6x16xf32>
    %77 = arith.addf %73, %76 : vector<4x6x16xf32>
    %c0_81 = arith.constant 0 : index
    %c4 = arith.constant 4 : index
    %c0_82 = arith.constant 0 : index
    %78 = vector.load %arg1[%c0_81, %c4, %c0_82] : memref<4x16x16xf32, #tpu.memory_space<vmem>>, vector<4x6x16xf32>
    %cst_83 = arith.constant 0.136193708 : f32
    %79 = vector.broadcast %cst_83 : f32 to vector<4x6x16xf32>
    %80 = arith.mulf %79, %78 : vector<4x6x16xf32>
    %81 = arith.addf %77, %80 : vector<4x6x16xf32>
    "tpu.trace_start"() <{level = 10 : i32, message = "brs,bsc->brc"}> : () -> ()
    %cst_84 = arith.constant dense<0.000000e+00> : vector<4x6x16xf32>
    %82 = tpu.matmul %81, %2, %cst_84 {dimension_numbers = #tpu.dot_dimension_numbers<[2], [1], [1], [2], [0, 0, 0, 1, 1, 2], [0], [0]>} : vector<4x6x16xf32>, vector<4x16x16xf32>, vector<4x6x16xf32> -> vector<4x6x16xf32>
    "tpu.trace_stop"() : () -> ()
    %c0_85 = arith.constant 0 : index
    %c2_86 = arith.constant 2 : index
    %c0_87 = arith.constant 0 : index
    %83 = vector.load %arg3[%c0_85, %c2_86, %c0_87] : memref<4x16x16xf32, #tpu.memory_space<vmem>>, vector<4x6x16xf32>
    tpu.vector_store %arg3[%c0_85, %c2_86, %c0_87], %82 {strides = array<i32>} : memref<4x16x16xf32, #tpu.memory_space<vmem>>, vector<4x6x16xf32>,
    %c0_88 = arith.constant 0 : index
    %c6 = arith.constant 6 : index
    %c0_89 = arith.constant 0 : index
    %84 = vector.load %arg1[%c0_88, %c6, %c0_89] : memref<4x16x16xf32, #tpu.memory_space<vmem>>, vector<4x6x16xf32>
    %cst_90 = arith.constant 0.136193708 : f32
    %85 = vector.broadcast %cst_90 : f32 to vector<4x6x16xf32>
    %86 = arith.mulf %85, %84 : vector<4x6x16xf32>
    %c0_91 = arith.constant 0 : index
    %c7 = arith.constant 7 : index
    %c0_92 = arith.constant 0 : index
    %87 = vector.load %arg1[%c0_91, %c7, %c0_92] : memref<4x16x16xf32, #tpu.memory_space<vmem>>, vector<4x6x16xf32>
    %cst_93 = arith.constant 0.228247851 : f32
    %88 = vector.broadcast %cst_93 : f32 to vector<4x6x16xf32>
    %89 = arith.mulf %88, %87 : vector<4x6x16xf32>
    %90 = arith.addf %86, %89 : vector<4x6x16xf32>
    %c0_94 = arith.constant 0 : index
    %c8 = arith.constant 8 : index
    %c0_95 = arith.constant 0 : index
    %91 = vector.load %arg1[%c0_94, %c8, %c0_95] : memref<4x16x16xf32, #tpu.memory_space<vmem>>, vector<4x6x16xf32>
    %cst_96 = arith.constant 0.271116883 : f32
    %92 = vector.broadcast %cst_96 : f32 to vector<4x6x16xf32>
    %93 = arith.mulf %92, %91 : vector<4x6x16xf32>
    %94 = arith.addf %90, %93 : vector<4x6x16xf32>
    %c0_97 = arith.constant 0 : index
    %c9 = arith.constant 9 : index
    %c0_98 = arith.constant 0 : index
    %95 = vector.load %arg1[%c0_97, %c9, %c0_98] : memref<4x16x16xf32, #tpu.memory_space<vmem>>, vector<4x6x16xf32>
    %cst_99 = arith.constant 0.228247851 : f32
    %96 = vector.broadcast %cst_99 : f32 to vector<4x6x16xf32>
    %97 = arith.mulf %96, %95 : vector<4x6x16xf32>
    %98 = arith.addf %94, %97 : vector<4x6x16xf32>
    %c0_100 = arith.constant 0 : index
    %c10 = arith.constant 10 : index
    %c0_101 = arith.constant 0 : index
    %99 = vector.load %arg1[%c0_100, %c10, %c0_101] : memref<4x16x16xf32, #tpu.memory_space<vmem>>, vector<4x6x16xf32>
    %cst_102 = arith.constant 0.136193708 : f32
    %100 = vector.broadcast %cst_102 : f32 to vector<4x6x16xf32>
    %101 = arith.mulf %100, %99 : vector<4x6x16xf32>
    %102 = arith.addf %98, %101 : vector<4x6x16xf32>
    "tpu.trace_start"() <{level = 10 : i32, message = "brs,bsc->brc"}> : () -> ()
    %cst_103 = arith.constant dense<0.000000e+00> : vector<4x6x16xf32>
    %103 = tpu.matmul %102, %2, %cst_103 {dimension_numbers = #tpu.dot_dimension_numbers<[2], [1], [1], [2], [0, 0, 0, 1, 1, 2], [0], [0]>} : vector<4x6x16xf32>, vector<4x16x16xf32>, vector<4x6x16xf32> -> vector<4x6x16xf32>
    "tpu.trace_stop"() : () -> ()
    %c0_104 = arith.constant 0 : index
    %c8_105 = arith.constant 8 : index
    %c0_106 = arith.constant 0 : index
    %104 = vector.load %arg3[%c0_104, %c8_105, %c0_106] : memref<4x16x16xf32, #tpu.memory_space<vmem>>, vector<4x6x16xf32>
    tpu.vector_store %arg3[%c0_104, %c8_105, %c0_106], %103 {strides = array<i32>} : memref<4x16x16xf32, #tpu.memory_space<vmem>>, vector<4x6x16xf32>,
    return
  }
  func.func @transform_0(%arg0: i32) -> (i32, i32, i32) {
    %c0_i32 = arith.constant 0 : i32
    %c0_i32_0 = arith.constant 0 : i32
    %c0_i32_1 = arith.constant 0 : i32
    return %arg0, %c0_i32, %c0_i32_0 : i32, i32, i32
  }
  func.func @transform_1(%arg0: i32) -> (i32, i32) {
    %c0_i32 = arith.constant 0 : i32
    %c0_i32_0 = arith.constant 0 : i32
    %c0_i32_1 = arith.constant 0 : i32
    return %c0_i32, %c0_i32_0 : i32, i32
  }
  func.func @transform_2(%arg0: i32) -> (i32, i32, i32) {
    %c0_i32 = arith.constant 0 : i32
    %c0_i32_0 = arith.constant 0 : i32
    %c0_i32_1 = arith.constant 0 : i32
    return %arg0, %c0_i32, %c0_i32_0 : i32, i32, i32
  }
}

</mosaic_0001>

<llo_original>
// kernel: tpu_custom_call.1
$region0: #{tpu_custom_call.1}
  #allocation0 [shape = 'u32[]', space=smem, size = 0x4, offset = 0x4, fixed_abs, tag = 'smem constant byte address 0x4 - core index']
  #allocation1 [shape = 'u32[144,128]{1,0:T(1,128)}', space=vmem, size = 0x12000, scoped, tag = 'internal scratch']
  %s0 = inlined_call_operand.hbm [shape: f32[8,16,16], index: 0, kind: input, shape index: {}]
  %s1 = inlined_call_operand.hbm [shape: f32[16,16], index: 1, kind: input, shape index: {}]
  %s2 = inlined_call_operand.hbm [shape: f32[8,16,16], index: 2, kind: output, shape index: {}]
  %s3 = sld [smem:[#allocation0]]
  $region49: #{tpu_custom_call.1} parent=0
    _
  %s5 = ssub.s32 1, %s3
  %s6 = scalar_select 0, %s5, %s3
  $region1: #{tpu_custom_call.1} parent=0
    #allocation2 [shape = 'u8[65536]{0}', space=vmem, size = 0x10000, scoped, tag = 'input window, operand 0']
    #allocation3 [shape = 's32[2]{0}', space=sflag, size = 0x8, scoped, tag = 'scoped memory for tpu_custom_call.1']
    #allocation4 [shape = 's32[2]{0}', space=sflag, size = 0x8, scoped, tag = 'scoped memory for tpu_custom_call.1']
    #allocation5 [shape = 'u8[8192]{0}', space=vmem, size = 0x2000, scoped, tag = 'input window, operand 1, single buffered']
    #allocation6 [shape = 's32[1]{0}', space=sflag, size = 0x4, scoped, tag = 'scoped memory for tpu_custom_call.1']
    #allocation7 [shape = 'u8[65536]{0}', space=vmem, size = 0x10000, scoped, tag = 'output window, operand 0']
    %7 = vsyncpa [#allocation3], 0
    %s8 = scalar_lea.sflag [#allocation3], 1
    %9 = vsyncpa %s8, 0
    %10 = vsyncpa [#allocation6], 0
    %11 = vsyncpa [#allocation4], 0
    %s12 = scalar_lea.sflag [#allocation4], 1
    %13 = vsyncpa %s12, 0
    loop: start=0, step=1, limit=4
    $region2: #{tpu_custom_call.1} parent=1 // loop_pre_header
      _
    $region3: #{tpu_custom_call.1} parent=1 // loop_header
      %s15 = sphi 0, %s19
      %p16 = scmp.ge.s32.totalorder %s15, 4
      %s25 = sphi 0, %s27
      %s28 = sphi 0, %s25
      %s29 = sphi 0, %s28
      %s45 = sphi 0, %s29
      %s49 = sphi 0, %s49
      %s51 = sphi 0, %s49
      %s52 = sphi 0, %s51
      %s66 = sphi 0, %s52
      %s72 = sphi 0, %s74
      %s75 = sphi 0, %s72
      %s76 = sphi 0, %s75
      %s92 = sphi 0, %s76
    $region4: #{tpu_custom_call.1} parent=1 // loop_header_branch
      %18 = sbr.rel (%p16) target = $region8
    $region5: #{tpu_custom_call.1} parent=1 // loop_body
      %s20 = ssub.s32 %s15, 1
      %s21 = ssub.s32 %s15, 2
      %s22 = sadd.s32 %s15, 1
      %s23 = ssub.s32 %s15, %s22
      %p24 = scmp.eq.s32.totalorder %s23, 0
      %s26 = sadd.s32 %s25, 1
      %s27 = scalar_select %p24, %s25, %s26
      %p30 = pneg %p24
      %p31 = scmp.eq.s32.totalorder %s15, 1
      %p32 = por %p30, %p31
      %p33 = scmp.ne.s32.totalorder %s25, %s28
      %p34 = scmp.eq.s32.totalorder %s15, 0
      %p35 = por %p33, %p34
      %p36 = scmp.ne.s32.totalorder %s25, %s28
      %p37 = scmp.eq.s32.totalorder %s20, 1
      %p38 = por %p36, %p37
      %p39 = scmp.ne.s32.totalorder %s28, %s29
      %p40 = scmp.eq.s32.totalorder %s20, 0
      %p41 = por %p39, %p40
      %p42 = scmp.ne.s32.totalorder %s28, %s29
      %p43 = scmp.eq.s32.totalorder %s21, 1
      %p44 = por %p42, %p43
      %p46 = scmp.ne.s32.totalorder %s29, %s45
      %p47 = scmp.eq.s32.totalorder %s21, 0
      %p48 = por %p46, %p47
      %s50 = sadd.s32 %s49, 1
      %p53 = scmp.eq.s32.totalorder %s15, 1
      %p54 = scmp.ne.s32.totalorder %s49, %s51
      %p55 = scmp.eq.s32.totalorder %s15, 0
      %p56 = por %p54, %p55
      %p57 = scmp.ne.s32.totalorder %s49, %s51
      %p58 = scmp.eq.s32.totalorder %s20, 1
      %p59 = por %p57, %p58
      %p60 = scmp.ne.s32.totalorder %s51, %s52
      %p61 = scmp.eq.s32.totalorder %s20, 0
      %p62 = por %p60, %p61
      %p63 = scmp.ne.s32.totalorder %s51, %s52
      %p64 = scmp.eq.s32.totalorder %s21, 1
      %p65 = por %p63, %p64
      %p67 = scmp.ne.s32.totalorder %s52, %s66
      %p68 = scmp.eq.s32.totalorder %s21, 0
      %p69 = por %p67, %p68
      %s70 = ssub.s32 %s15, %s22
      %p71 = scmp.eq.s32.totalorder %s70, 0
      %s73 = sadd.s32 %s72, 1
      %s74 = scalar_select %p71, %s72, %s73
      %p77 = pneg %p71
      %p78 = scmp.eq.s32.totalorder %s15, 1
      %p79 = por %p77, %p78
      %p80 = scmp.ne.s32.totalorder %s72, %s75
      %p81 = scmp.eq.s32.totalorder %s15, 0
      %p82 = por %p80, %p81
      %p83 = scmp.ne.s32.totalorder %s72, %s75
      %p84 = scmp.eq.s32.totalorder %s20, 1
      %p85 = por %p83, %p84
      %p86 = scmp.ne.s32.totalorder %s75, %s76
      %p87 = scmp.eq.s32.totalorder %s20, 0
      %p88 = por %p86, %p87
      %p89 = scmp.ne.s32.totalorder %s75, %s76
      %p90 = scmp.eq.s32.totalorder %s21, 1
      %p91 = por %p89, %p90
      %p93 = scmp.ne.s32.totalorder %s76, %s92
      %p94 = scmp.eq.s32.totalorder %s21, 0
      %p95 = por %p93, %p94
      %p96 = scmp.le.s32.totalorder 1, %s15
      %p97 = scmp.lt.s32.totalorder %s15, 3
      %p98 = pnand %p96, %p97
      %p99 = pneg %p98
      // Predicated region
      $region9: #{tpu_custom_call.1} parent=5 // pred_check
        _
      $region10: #{tpu_custom_call.1} parent=5 // pred_check_branch
        %101 = sbr.rel (%p98) target = $region12
      $region11: #{tpu_custom_call.1} parent=5 // pred_region
        %s102 = ssub.s32 %s15, 1
        // Predicated region
        $region13: #{tpu_custom_call.1} parent=11 // pred_check
          %p103 = pneg %p62
        $region14: #{tpu_custom_call.1} parent=11 // pred_check_branch
          %105 = sbr.rel (%p103) target = $region16
        $region15: #{tpu_custom_call.1} parent=11 // pred_region
          %s107 = ssub.s32 256, 256
          %108 = vsyncadd [#allocation6], %s107
          %s109 = sshll.u32 [#allocation5], 4
          %s110 = int_to_ptr.vmem [resolvable:$true] %s109
          %115 = dma.hbm_to_vmem [thread:$0]  %s1, 256, %s110, [#allocation6], 128, 128, 8
        $region16: #{tpu_custom_call.1} parent=11 // pred_fallthru
          _
      $region12: #{tpu_custom_call.1} parent=5 // pred_fallthru
        _
      %p116 = scmp.lt.s32.totalorder %s15, 2
      // Predicated region
      $region17: #{tpu_custom_call.1} parent=5 // pred_check
        %p117 = pneg %p116
      $region18: #{tpu_custom_call.1} parent=5 // pred_check_branch
        %119 = sbr.rel (%p117) target = $region20
      $region19: #{tpu_custom_call.1} parent=5 // pred_region
        // Predicated region
        $region21: #{tpu_custom_call.1} parent=19 // pred_check
          %p120 = pneg %p35
        $region22: #{tpu_custom_call.1} parent=19 // pred_check_branch
          %122 = sbr.rel (%p120) target = $region24
        $region23: #{tpu_custom_call.1} parent=19 // pred_region
          %s123 = sand.u32 %s25, 1
          %s124 = scalar_lea.sflag [#allocation3], %s123
          %s125 = sand.u32 %s25, 1
          %s126 = smul.addr %s125, 64
          %s127 = scalar_lea.vmem [#allocation2], %s126
          %s128 = smul.u32 4, %s15
          %s130 = ssub.s32 1024, 1024
          %131 = vsyncadd %s124, %s130
          %s132 = smul.addr %s128, 2
          %s133 = smul.addr %s132, 128
          %s134 = scalar_lea.hbm %s0, %s133
          %s135 = sshll.u32 %s127, 4
          %s136 = int_to_ptr.vmem [resolvable:$true] %s135
          %141 = dma.hbm_to_vmem [thread:$0]  %s134, 1024, %s136, %s124, 128, 128, 8
        $region24: #{tpu_custom_call.1} parent=19 // pred_fallthru
          _
      $region20: #{tpu_custom_call.1} parent=5 // pred_fallthru
        _
      %p142 = scmp.le.s32.totalorder 1, %s15
      %p143 = scmp.lt.s32.totalorder %s15, 3
      %p144 = pnand %p142, %p143
      %p145 = pneg %p144
      // Predicated region
      $region25: #{tpu_custom_call.1} parent=5 // pred_check
        _
      $region26: #{tpu_custom_call.1} parent=5 // pred_check_branch
        %147 = sbr.rel (%p144) target = $region28
      $region27: #{tpu_custom_call.1} parent=5 // pred_region
        %s148 = ssub.s32 %s15, 1
        %s149 = sand.u32 %s28, 1
        %s150 = scalar_lea.sflag [#allocation3], %s149
        %s151 = sand.u32 %s28, 1
        %s152 = smul.addr %s151, 64
        %s153 = scalar_lea.vmem [#allocation2], %s152
        // Predicated region
        $region29: #{tpu_custom_call.1} parent=27 // pred_check
          %p154 = pneg %p41
        $region30: #{tpu_custom_call.1} parent=27 // pred_check_branch
          %156 = sbr.rel (%p154) target = $region32
        $region31: #{tpu_custom_call.1} parent=27 // pred_region
          %157 = dma.done %s150, 1024
        $region32: #{tpu_custom_call.1} parent=27 // pred_fallthru
          _
        // Predicated region
        $region33: #{tpu_custom_call.1} parent=27 // pred_check
          %p158 = pneg %p62
        $region34: #{tpu_custom_call.1} parent=27 // pred_check_branch
          %160 = sbr.rel (%p158) target = $region36
        $region35: #{tpu_custom_call.1} parent=27 // pred_region
          %161 = dma.done [#allocation6], 256
        $region36: #{tpu_custom_call.1} parent=27 // pred_fallthru
          _
        %s162 = sand.u32 %s28, 1
        %s163 = scalar_lea.sflag [#allocation3], %s162
        %s164 = sand.u32 %s28, 1
        %s165 = smul.addr %s164, 64
        %s166 = scalar_lea.vmem [#allocation2], %s165
        %p167 = pneg %p41
        %p168 = pneg %p38
        %p169 = pneg %p62
        %p170 = pneg %p59
        %p171 = pneg %p88
        %p172 = pneg %p85
        %s173 = sand.u32 %s75, 1
        %s174 = scalar_lea.sflag [#allocation4], %s173
        %s175 = sand.u32 %s75, 1
        %s176 = smul.addr %s175, 64
        %s177 = scalar_lea.vmem [#allocation7], %s176
        %s178 = smul.u32 4, %s20
        %s179 = smul.u32 4, %s20
        %v180 = vld [vmem:[#allocation5] sm:$0xff]
        %v181 = vld [vmem:[#allocation5 + $0x8] sm:$0xff]
        %v182 = vld [vmem:[%s153] sm:$0x1]
        %v183 = vld [vmem:[%s153 + $0x10] sm:$0x1]
        %v184 = vld [vmem:[%s153 + $0x20] sm:$0x1]
        %v185 = vld [vmem:[%s153 + $0x30] sm:$0x1]
        %v186 = vmul.f32 %v182, 0.27111688
        %v187 = vmul.f32 %v183, 0.27111688
        %v188 = vmul.f32 %v184, 0.27111688
        %v189 = vmul.f32 %v185, 0.27111688
        %v190 = vld [vmem:[%s153 + $0x1] sm:$0x1]
        %v191 = vld [vmem:[%s153 + $0x11] sm:$0x1]
        %v192 = vld [vmem:[%s153 + $0x21] sm:$0x1]
        %v193 = vld [vmem:[%s153 + $0x31] sm:$0x1]
        %v194 = vmul.f32 %v190, 0.4564957
        %v195 = vmul.f32 %v191, 0.4564957
        %v196 = vmul.f32 %v192, 0.4564957
        %v197 = vmul.f32 %v193, 0.4564957
        %v198 = vadd.f32 %v186, %v194
        %v199 = vadd.f32 %v187, %v195
        %v200 = vadd.f32 %v188, %v196
        %v201 = vadd.f32 %v189, %v197
        %v202 = vld [vmem:[%s153 + $0x2] sm:$0x1]
        %v203 = vld [vmem:[%s153 + $0x12] sm:$0x1]
        %v204 = vld [vmem:[%s153 + $0x22] sm:$0x1]
        %v205 = vld [vmem:[%s153 + $0x32] sm:$0x1]
        %v206 = vmul.f32 %v202, 0.27238742
        %v207 = vmul.f32 %v203, 0.27238742
        %v208 = vmul.f32 %v204, 0.27238742
        %v209 = vmul.f32 %v205, 0.27238742
        %v210 = vadd.f32 %v198, %v206
        %v211 = vadd.f32 %v199, %v207
        %v212 = vadd.f32 %v200, %v208
        %v213 = vadd.f32 %v201, %v209
        %vm214 = vcmask 130048
        %v216 = vsel %vm214, %v210, 0
        %218 = vmatprep.subr.mxu0 0.0
        %219 = vmatpush1.msra.mxu0 %v180
        %220 = vmatprep.subr.mxu0 0.0
        %221 = vmatpush1.msra.mxu0 %v181
        %222 = vmatprep.subr.mxu0 0.0
        %223 = vmatpush1.msra.mxu0 0.0
        %224 = vmatprep.subr.mxu0 0.0
        %225 = vmatpush1.msra.mxu0 0.0
        %226 = vmatprep.subr.mxu0 0.0
        %227 = vmatpush1.msra.mxu0 0.0
        %228 = vmatprep.subr.mxu0 0.0
        %229 = vmatpush1.msra.mxu0 0.0
        %230 = vmatprep.subr.mxu0 0.0
        %231 = vmatpush1.msra.mxu0 0.0
        %232 = vmatprep.subr.mxu0 0.0
        %233 = vmatpush1.msra.mxu0 0.0
        %234 = vmatprep.subr.mxu0 0.0
        %235 = vmatpush1.msra.mxu0 0.0
        %236 = vmatprep.subr.mxu0 0.0
        %237 = vmatpush1.msra.mxu0 0.0
        %238 = vmatprep.subr.mxu0 0.0
        %239 = vmatpush1.msra.mxu0 0.0
        %240 = vmatprep.subr.mxu0 0.0
        %241 = vmatpush1.msra.mxu0 0.0
        %242 = vmatprep.subr.mxu0 0.0
        %243 = vmatpush1.msra.mxu0 0.0
        %244 = vmatprep.subr.mxu0 0.0
        %245 = vmatpush1.msra.mxu0 0.0
        %246 = vmatprep.subr.mxu0 0.0
        %247 = vmatpush1.msra.mxu0 0.0
        %248 = vmatprep.subr.mxu0 0.0
        %249 = vmatpush1.msra.mxu0 0.0
        %250 = vmatprep.subr.mxu0 0.0
        %251 = vmatpush1.msra.mxu0 0.0
        %252 = vmatprep.subr.mxu0 0.0
        %253 = vmatpush1.msra.mxu0 0.0
        %254 = vmatprep.subr.mxu0 0.0
        %255 = vmatpush1.msra.mxu0 0.0
        %256 = vmatprep.subr.mxu0 0.0
        %257 = vmatpush1.msra.mxu0 0.0
        %258 = vmatprep.subr.mxu0 0.0
        %259 = vmatpush1.msra.mxu0 0.0
        %260 = vmatprep.subr.mxu0 0.0
        %261 = vmatpush1.msra.mxu0 0.0
        %262 = vmatprep.subr.mxu0 0.0
        %263 = vmatpush1.msra.mxu0 0.0
        %264 = vmatprep.subr.mxu0 0.0
        %265 = vmatpush1.msra.mxu0 0.0
        %266 = vmatprep.subr.mxu0 0.0
        %267 = vmatpush1.msra.mxu0 0.0
        %268 = vmatprep.subr.mxu0 0.0
        %269 = vmatpush1.msra.mxu0 0.0
        %270 = vmatprep.subr.mxu0 0.0
        %271 = vmatpush1.msra.mxu0 0.0
        %272 = vmatprep.subr.mxu0 0.0
        %273 = vmatpush1.msra.mxu0 0.0
        %274 = vmatprep.subr.mxu0 0.0
        %275 = vmatpush1.msra.mxu0 0.0
        %276 = vmatprep.subr.mxu0 0.0
        %277 = vmatpush1.msra.mxu0 0.0
        %278 = vmatprep.subr.mxu0 0.0
        %279 = vmatpush1.msra.mxu0 0.0
        %280 = vmatprep.subr.mxu0 0.0
        %281 = vmatpush1.msra.mxu0 0.0
        %282 = vmatprep.mubr.f32.mxu0 0.0
        %283 = vmatmul.mubr.f32.gmra.mrb[0].mxu0 %v216
        %v284 = vpop.f32.mrb[0].mxu0
        %v285 = vadd.f32 0.0, %v284
        %v286 = vpop.f32.mrb[0].mxu0
        %287 = vdwg.mxu0
        %v289 = vsel %vm214, %v211, 0
        %291 = vmatprep.subr.mxu0 0.0
        %292 = vmatpush1.msra.mxu0 %v180
        %293 = vmatprep.subr.mxu0 0.0
        %294 = vmatpush1.msra.mxu0 %v181
        %295 = vmatprep.subr.mxu0 0.0
        %296 = vmatpush1.msra.mxu0 0.0
        %297 = vmatprep.subr.mxu0 0.0
        %298 = vmatpush1.msra.mxu0 0.0
        %299 = vmatprep.subr.mxu0 0.0
        %300 = vmatpush1.msra.mxu0 0.0
        %301 = vmatprep.subr.mxu0 0.0
        %302 = vmatpush1.msra.mxu0 0.0
        %303 = vmatprep.subr.mxu0 0.0
        %304 = vmatpush1.msra.mxu0 0.0
        %305 = vmatprep.subr.mxu0 0.0
        %306 = vmatpush1.msra.mxu0 0.0
        %307 = vmatprep.subr.mxu0 0.0
        %308 = vmatpush1.msra.mxu0 0.0
        %309 = vmatprep.subr.mxu0 0.0
        %310 = vmatpush1.msra.mxu0 0.0
        %311 = vmatprep.subr.mxu0 0.0
        %312 = vmatpush1.msra.mxu0 0.0
        %313 = vmatprep.subr.mxu0 0.0
        %314 = vmatpush1.msra.mxu0 0.0
        %315 = vmatprep.subr.mxu0 0.0
        %316 = vmatpush1.msra.mxu0 0.0
        %317 = vmatprep.subr.mxu0 0.0
        %318 = vmatpush1.msra.mxu0 0.0
        %319 = vmatprep.subr.mxu0 0.0
        %320 = vmatpush1.msra.mxu0 0.0
        %321 = vmatprep.subr.mxu0 0.0
        %322 = vmatpush1.msra.mxu0 0.0
        %323 = vmatprep.subr.mxu0 0.0
        %324 = vmatpush1.msra.mxu0 0.0
        %325 = vmatprep.subr.mxu0 0.0
        %326 = vmatpush1.msra.mxu0 0.0
        %327 = vmatprep.subr.mxu0 0.0
        %328 = vmatpush1.msra.mxu0 0.0
        %329 = vmatprep.subr.mxu0 0.0
        %330 = vmatpush1.msra.mxu0 0.0
        %331 = vmatprep.subr.mxu0 0.0
        %332 = vmatpush1.msra.mxu0 0.0
        %333 = vmatprep.subr.mxu0 0.0
        %334 = vmatpush1.msra.mxu0 0.0
        %335 = vmatprep.subr.mxu0 0.0
        %336 = vmatpush1.msra.mxu0 0.0
        %337 = vmatprep.subr.mxu0 0.0
        %338 = vmatpush1.msra.mxu0 0.0
        %339 = vmatprep.subr.mxu0 0.0
        %340 = vmatpush1.msra.mxu0 0.0
        %341 = vmatprep.subr.mxu0 0.0
        %342 = vmatpush1.msra.mxu0 0.0
        %343 = vmatprep.subr.mxu0 0.0
        %344 = vmatpush1.msra.mxu0 0.0
        %345 = vmatprep.subr.mxu0 0.0
        %346 = vmatpush1.msra.mxu0 0.0
        %347 = vmatprep.subr.mxu0 0.0
        %348 = vmatpush1.msra.mxu0 0.0
        %349 = vmatprep.subr.mxu0 0.0
        %350 = vmatpush1.msra.mxu0 0.0
        %351 = vmatprep.subr.mxu0 0.0
        %352 = vmatpush1.msra.mxu0 0.0
        %353 = vmatprep.subr.mxu0 0.0
        %354 = vmatpush1.msra.mxu0 0.0
        %355 = vmatprep.mubr.f32.mxu0 0.0
        %356 = vmatmul.mubr.f32.gmra.mrb[0].mxu0 %v289
        %v357 = vpop.f32.mrb[0].mxu0
        %v358 = vadd.f32 0.0, %v357
        %v359 = vpop.f32.mrb[0].mxu0
        %360 = vdwg.mxu0
        %v362 = vsel %vm214, %v212, 0
        %364 = vmatprep.subr.mxu0 0.0
        %365 = vmatpush1.msra.mxu0 %v180
        %366 = vmatprep.subr.mxu0 0.0
        %367 = vmatpush1.msra.mxu0 %v181
        %368 = vmatprep.subr.mxu0 0.0
        %369 = vmatpush1.msra.mxu0 0.0
        %370 = vmatprep.subr.mxu0 0.0
        %371 = vmatpush1.msra.mxu0 0.0
        %372 = vmatprep.subr.mxu0 0.0
        %373 = vmatpush1.msra.mxu0 0.0
        %374 = vmatprep.subr.mxu0 0.0
        %375 = vmatpush1.msra.mxu0 0.0
        %376 = vmatprep.subr.mxu0 0.0
        %377 = vmatpush1.msra.mxu0 0.0
        %378 = vmatprep.subr.mxu0 0.0
        %379 = vmatpush1.msra.mxu0 0.0
        %380 = vmatprep.subr.mxu0 0.0
        %381 = vmatpush1.msra.mxu0 0.0
        %382 = vmatprep.subr.mxu0 0.0
        %383 = vmatpush1.msra.mxu0 0.0
        %384 = vmatprep.subr.mxu0 0.0
        %385 = vmatpush1.msra.mxu0 0.0
        %386 = vmatprep.subr.mxu0 0.0
        %387 = vmatpush1.msra.mxu0 0.0
        %388 = vmatprep.subr.mxu0 0.0
        %389 = vmatpush1.msra.mxu0 0.0
        %390 = vmatprep.subr.mxu0 0.0
        %391 = vmatpush1.msra.mxu0 0.0
        %392 = vmatprep.subr.mxu0 0.0
        %393 = vmatpush1.msra.mxu0 0.0
        %394 = vmatprep.subr.mxu0 0.0
        %395 = vmatpush1.msra.mxu0 0.0
        %396 = vmatprep.subr.mxu0 0.0
        %397 = vmatpush1.msra.mxu0 0.0
        %398 = vmatprep.subr.mxu0 0.0
        %399 = vmatpush1.msra.mxu0 0.0
        %400 = vmatprep.subr.mxu0 0.0
        %401 = vmatpush1.msra.mxu0 0.0
        %402 = vmatprep.subr.mxu0 0.0
        %403 = vmatpush1.msra.mxu0 0.0
        %404 = vmatprep.subr.mxu0 0.0
        %405 = vmatpush1.msra.mxu0 0.0
        %406 = vmatprep.subr.mxu0 0.0
        %407 = vmatpush1.msra.mxu0 0.0
        %408 = vmatprep.subr.mxu0 0.0
        %409 = vmatpush1.msra.mxu0 0.0
        %410 = vmatprep.subr.mxu0 0.0
        %411 = vmatpush1.msra.mxu0 0.0
        %412 = vmatprep.subr.mxu0 0.0
        %413 = vmatpush1.msra.mxu0 0.0
        %414 = vmatprep.subr.mxu0 0.0
        %415 = vmatpush1.msra.mxu0 0.0
        %416 = vmatprep.subr.mxu0 0.0
        %417 = vmatpush1.msra.mxu0 0.0
        %418 = vmatprep.subr.mxu0 0.0
        %419 = vmatpush1.msra.mxu0 0.0
        %420 = vmatprep.subr.mxu0 0.0
        %421 = vmatpush1.msra.mxu0 0.0
        %422 = vmatprep.subr.mxu0 0.0
        %423 = vmatpush1.msra.mxu0 0.0
        %424 = vmatprep.subr.mxu0 0.0
        %425 = vmatpush1.msra.mxu0 0.0
        %426 = vmatprep.subr.mxu0 0.0
        %427 = vmatpush1.msra.mxu0 0.0
        %428 = vmatprep.mubr.f32.mxu0 0.0
        %429 = vmatmul.mubr.f32.gmra.mrb[0].mxu0 %v362
        %v430 = vpop.f32.mrb[0].mxu0
        %v431 = vadd.f32 0.0, %v430
        %v432 = vpop.f32.mrb[0].mxu0
        %433 = vdwg.mxu0
        %v435 = vsel %vm214, %v213, 0
        %437 = vmatprep.subr.mxu0 0.0
        %438 = vmatpush1.msra.mxu0 %v180
        %439 = vmatprep.subr.mxu0 0.0
        %440 = vmatpush1.msra.mxu0 %v181
        %441 = vmatprep.subr.mxu0 0.0
        %442 = vmatpush1.msra.mxu0 0.0
        %443 = vmatprep.subr.mxu0 0.0
        %444 = vmatpush1.msra.mxu0 0.0
        %445 = vmatprep.subr.mxu0 0.0
        %446 = vmatpush1.msra.mxu0 0.0
        %447 = vmatprep.subr.mxu0 0.0
        %448 = vmatpush1.msra.mxu0 0.0
        %449 = vmatprep.subr.mxu0 0.0
        %450 = vmatpush1.msra.mxu0 0.0
        %451 = vmatprep.subr.mxu0 0.0
        %452 = vmatpush1.msra.mxu0 0.0
        %453 = vmatprep.subr.mxu0 0.0
        %454 = vmatpush1.msra.mxu0 0.0
        %455 = vmatprep.subr.mxu0 0.0
        %456 = vmatpush1.msra.mxu0 0.0
        %457 = vmatprep.subr.mxu0 0.0
        %458 = vmatpush1.msra.mxu0 0.0
        %459 = vmatprep.subr.mxu0 0.0
        %460 = vmatpush1.msra.mxu0 0.0
        %461 = vmatprep.subr.mxu0 0.0
        %462 = vmatpush1.msra.mxu0 0.0
        %463 = vmatprep.subr.mxu0 0.0
        %464 = vmatpush1.msra.mxu0 0.0
        %465 = vmatprep.subr.mxu0 0.0
        %466 = vmatpush1.msra.mxu0 0.0
        %467 = vmatprep.subr.mxu0 0.0
        %468 = vmatpush1.msra.mxu0 0.0
        %469 = vmatprep.subr.mxu0 0.0
        %470 = vmatpush1.msra.mxu0 0.0
        %471 = vmatprep.subr.mxu0 0.0
        %472 = vmatpush1.msra.mxu0 0.0
        %473 = vmatprep.subr.mxu0 0.0
        %474 = vmatpush1.msra.mxu0 0.0
        %475 = vmatprep.subr.mxu0 0.0
        %476 = vmatpush1.msra.mxu0 0.0
        %477 = vmatprep.subr.mxu0 0.0
        %478 = vmatpush1.msra.mxu0 0.0
        %479 = vmatprep.subr.mxu0 0.0
        %480 = vmatpush1.msra.mxu0 0.0
        %481 = vmatprep.subr.mxu0 0.0
        %482 = vmatpush1.msra.mxu0 0.0
        %483 = vmatprep.subr.mxu0 0.0
        %484 = vmatpush1.msra.mxu0 0.0
        %485 = vmatprep.subr.mxu0 0.0
        %486 = vmatpush1.msra.mxu0 0.0
        %487 = vmatprep.subr.mxu0 0.0
        %488 = vmatpush1.msra.mxu0 0.0
        %489 = vmatprep.subr.mxu0 0.0
        %490 = vmatpush1.msra.mxu0 0.0
        %491 = vmatprep.subr.mxu0 0.0
        %492 = vmatpush1.msra.mxu0 0.0
        %493 = vmatprep.subr.mxu0 0.0
        %494 = vmatpush1.msra.mxu0 0.0
        %495 = vmatprep.subr.mxu0 0.0
        %496 = vmatpush1.msra.mxu0 0.0
        %497 = vmatprep.subr.mxu0 0.0
        %498 = vmatpush1.msra.mxu0 0.0
        %499 = vmatprep.subr.mxu0 0.0
        %500 = vmatpush1.msra.mxu0 0.0
        %501 = vmatprep.mubr.f32.mxu0 0.0
        %502 = vmatmul.mubr.f32.gmra.mrb[0].mxu0 %v435
        %v503 = vpop.f32.mrb[0].mxu0
        %v504 = vadd.f32 0.0, %v503
        %v505 = vpop.f32.mrb[0].mxu0
        %506 = vdwg.mxu0
        %vm507 = vcmask 122880
        %508 = vst.msk [vmem:[%s177] sm:$0x1] %vm507, %v285
        %509 = vst.msk [vmem:[%s177 + $0x10] sm:$0x1] %vm507, %v358
        %510 = vst.msk [vmem:[%s177 + $0x20] sm:$0x1] %vm507, %v431
        %511 = vst.msk [vmem:[%s177 + $0x30] sm:$0x1] %vm507, %v504
        %v512 = vld [vmem:[%s153] sm:$0x1]
        %v513 = vld [vmem:[%s153 + $0x10] sm:$0x1]
        %v514 = vld [vmem:[%s153 + $0x20] sm:$0x1]
        %v515 = vld [vmem:[%s153 + $0x30] sm:$0x1]
        %v516 = vmul.f32 %v512, 0.22824785
        %v517 = vmul.f32 %v513, 0.22824785
        %v518 = vmul.f32 %v514, 0.22824785
        %v519 = vmul.f32 %v515, 0.22824785
        %v520 = vld [vmem:[%s153 + $0x1] sm:$0x1]
        %v521 = vld [vmem:[%s153 + $0x11] sm:$0x1]
        %v522 = vld [vmem:[%s153 + $0x21] sm:$0x1]
        %v523 = vld [vmem:[%s153 + $0x31] sm:$0x1]
        %v524 = vmul.f32 %v520, 0.4073106
        %v525 = vmul.f32 %v521, 0.4073106
        %v526 = vmul.f32 %v522, 0.4073106
        %v527 = vmul.f32 %v523, 0.4073106
        %v528 = vadd.f32 %v516, %v524
        %v529 = vadd.f32 %v517, %v525
        %v530 = vadd.f32 %v518, %v526
        %v531 = vadd.f32 %v519, %v527
        %v532 = vld [vmem:[%s153 + $0x2] sm:$0x1]
        %v533 = vld [vmem:[%s153 + $0x12] sm:$0x1]
        %v534 = vld [vmem:[%s153 + $0x22] sm:$0x1]
        %v535 = vld [vmem:[%s153 + $0x32] sm:$0x1]
        %v536 = vmul.f32 %v532, 0.22824785
        %v537 = vmul.f32 %v533, 0.22824785
        %v538 = vmul.f32 %v534, 0.22824785
        %v539 = vmul.f32 %v535, 0.22824785
        %v540 = vadd.f32 %v528, %v536
        %v541 = vadd.f32 %v529, %v537
        %v542 = vadd.f32 %v530, %v538
        %v543 = vadd.f32 %v531, %v539
        %v544 = vld [vmem:[%s153 + $0x3] sm:$0x1]
        %v545 = vld [vmem:[%s153 + $0x13] sm:$0x1]
        %v546 = vld [vmem:[%s153 + $0x23] sm:$0x1]
        %v547 = vld [vmem:[%s153 + $0x33] sm:$0x1]
        %v548 = vmul.f32 %v544, 0.13619371
        %v549 = vmul.f32 %v545, 0.13619371
        %v550 = vmul.f32 %v546, 0.13619371
        %v551 = vmul.f32 %v547, 0.13619371
        %v552 = vadd.f32 %v540, %v548
        %v553 = vadd.f32 %v541, %v549
        %v554 = vadd.f32 %v542, %v550
        %v555 = vadd.f32 %v543, %v551
        %v557 = vsel %vm214, %v552, 0
        %559 = vmatprep.subr.mxu0 0.0
        %560 = vmatpush1.msra.mxu0 %v180
        %561 = vmatprep.subr.mxu0 0.0
        %562 = vmatpush1.msra.mxu0 %v181
        %563 = vmatprep.subr.mxu0 0.0
        %564 = vmatpush1.msra.mxu0 0.0
        %565 = vmatprep.subr.mxu0 0.0
        %566 = vmatpush1.msra.mxu0 0.0
        %567 = vmatprep.subr.mxu0 0.0
        %568 = vmatpush1.msra.mxu0 0.0
        %569 = vmatprep.subr.mxu0 0.0
        %570 = vmatpush1.msra.mxu0 0.0
        %571 = vmatprep.subr.mxu0 0.0
        %572 = vmatpush1.msra.mxu0 0.0
        %573 = vmatprep.subr.mxu0 0.0
        %574 = vmatpush1.msra.mxu0 0.0
        %575 = vmatprep.subr.mxu0 0.0
        %576 = vmatpush1.msra.mxu0 0.0
        %577 = vmatprep.subr.mxu0 0.0
        %578 = vmatpush1.msra.mxu0 0.0
        %579 = vmatprep.subr.mxu0 0.0
        %580 = vmatpush1.msra.mxu0 0.0
        %581 = vmatprep.subr.mxu0 0.0
        %582 = vmatpush1.msra.mxu0 0.0
        %583 = vmatprep.subr.mxu0 0.0
        %584 = vmatpush1.msra.mxu0 0.0
        %585 = vmatprep.subr.mxu0 0.0
        %586 = vmatpush1.msra.mxu0 0.0
        %587 = vmatprep.subr.mxu0 0.0
        %588 = vmatpush1.msra.mxu0 0.0
        %589 = vmatprep.subr.mxu0 0.0
        %590 = vmatpush1.msra.mxu0 0.0
        %591 = vmatprep.subr.mxu0 0.0
        %592 = vmatpush1.msra.mxu0 0.0
        %593 = vmatprep.subr.mxu0 0.0
        %594 = vmatpush1.msra.mxu0 0.0
        %595 = vmatprep.subr.mxu0 0.0
        %596 = vmatpush1.msra.mxu0 0.0
        %597 = vmatprep.subr.mxu0 0.0
        %598 = vmatpush1.msra.mxu0 0.0
        %599 = vmatprep.subr.mxu0 0.0
        %600 = vmatpush1.msra.mxu0 0.0
        %601 = vmatprep.subr.mxu0 0.0
        %602 = vmatpush1.msra.mxu0 0.0
        %603 = vmatprep.subr.mxu0 0.0
        %604 = vmatpush1.msra.mxu0 0.0
        %605 = vmatprep.subr.mxu0 0.0
        %606 = vmatpush1.msra.mxu0 0.0
        %607 = vmatprep.subr.mxu0 0.0
        %608 = vmatpush1.msra.mxu0 0.0
        %609 = vmatprep.subr.mxu0 0.0
        %610 = vmatpush1.msra.mxu0 0.0
        %611 = vmatprep.subr.mxu0 0.0
        %612 = vmatpush1.msra.mxu0 0.0
        %613 = vmatprep.subr.mxu0 0.0
        %614 = vmatpush1.msra.mxu0 0.0
        %615 = vmatprep.subr.mxu0 0.0
        %616 = vmatpush1.msra.mxu0 0.0
        %617 = vmatprep.subr.mxu0 0.0
        %618 = vmatpush1.msra.mxu0 0.0
        %619 = vmatprep.subr.mxu0 0.0
        %620 = vmatpush1.msra.mxu0 0.0
        %621 = vmatprep.subr.mxu0 0.0
        %622 = vmatpush1.msra.mxu0 0.0
        %623 = vmatprep.mubr.f32.mxu0 0.0
        %624 = vmatmul.mubr.f32.gmra.mrb[0].mxu0 %v557
        %v625 = vpop.f32.mrb[0].mxu0
        %v626 = vadd.f32 0.0, %v625
        %v627 = vpop.f32.mrb[0].mxu0
        %628 = vdwg.mxu0
        %v630 = vsel %vm214, %v553, 0
        %632 = vmatprep.subr.mxu0 0.0
        %633 = vmatpush1.msra.mxu0 %v180
        %634 = vmatprep.subr.mxu0 0.0
        %635 = vmatpush1.msra.mxu0 %v181
        %636 = vmatprep.subr.mxu0 0.0
        %637 = vmatpush1.msra.mxu0 0.0
        %638 = vmatprep.subr.mxu0 0.0
        %639 = vmatpush1.msra.mxu0 0.0
        %640 = vmatprep.subr.mxu0 0.0
        %641 = vmatpush1.msra.mxu0 0.0
        %642 = vmatprep.subr.mxu0 0.0
        %643 = vmatpush1.msra.mxu0 0.0
        %644 = vmatprep.subr.mxu0 0.0
        %645 = vmatpush1.msra.mxu0 0.0
        %646 = vmatprep.subr.mxu0 0.0
        %647 = vmatpush1.msra.mxu0 0.0
        %648 = vmatprep.subr.mxu0 0.0
        %649 = vmatpush1.msra.mxu0 0.0
        %650 = vmatprep.subr.mxu0 0.0
        %651 = vmatpush1.msra.mxu0 0.0
        %652 = vmatprep.subr.mxu0 0.0
        %653 = vmatpush1.msra.mxu0 0.0
        %654 = vmatprep.subr.mxu0 0.0
        %655 = vmatpush1.msra.mxu0 0.0
        %656 = vmatprep.subr.mxu0 0.0
        %657 = vmatpush1.msra.mxu0 0.0
        %658 = vmatprep.subr.mxu0 0.0
        %659 = vmatpush1.msra.mxu0 0.0
        %660 = vmatprep.subr.mxu0 0.0
        %661 = vmatpush1.msra.mxu0 0.0
        %662 = vmatprep.subr.mxu0 0.0
        %663 = vmatpush1.msra.mxu0 0.0
        %664 = vmatprep.subr.mxu0 0.0
        %665 = vmatpush1.msra.mxu0 0.0
        %666 = vmatprep.subr.mxu0 0.0
        %667 = vmatpush1.msra.mxu0 0.0
        %668 = vmatprep.subr.mxu0 0.0
        %669 = vmatpush1.msra.mxu0 0.0
        %670 = vmatprep.subr.mxu0 0.0
        %671 = vmatpush1.msra.mxu0 0.0
        %672 = vmatprep.subr.mxu0 0.0
        %673 = vmatpush1.msra.mxu0 0.0
        %674 = vmatprep.subr.mxu0 0.0
        %675 = vmatpush1.msra.mxu0 0.0
        %676 = vmatprep.subr.mxu0 0.0
        %677 = vmatpush1.msra.mxu0 0.0
        %678 = vmatprep.subr.mxu0 0.0
        %679 = vmatpush1.msra.mxu0 0.0
        %680 = vmatprep.subr.mxu0 0.0
        %681 = vmatpush1.msra.mxu0 0.0
        %682 = vmatprep.subr.mxu0 0.0
        %683 = vmatpush1.msra.mxu0 0.0
        %684 = vmatprep.subr.mxu0 0.0
        %685 = vmatpush1.msra.mxu0 0.0
        %686 = vmatprep.subr.mxu0 0.0
        %687 = vmatpush1.msra.mxu0 0.0
        %688 = vmatprep.subr.mxu0 0.0
        %689 = vmatpush1.msra.mxu0 0.0
        %690 = vmatprep.subr.mxu0 0.0
        %691 = vmatpush1.msra.mxu0 0.0
        %692 = vmatprep.subr.mxu0 0.0
        %693 = vmatpush1.msra.mxu0 0.0
        %694 = vmatprep.subr.mxu0 0.0
        %695 = vmatpush1.msra.mxu0 0.0
        %696 = vmatprep.mubr.f32.mxu0 0.0
        %697 = vmatmul.mubr.f32.gmra.mrb[0].mxu0 %v630
        %v698 = vpop.f32.mrb[0].mxu0
        %v699 = vadd.f32 0.0, %v698
        %v700 = vpop.f32.mrb[0].mxu0
        %701 = vdwg.mxu0
        %v703 = vsel %vm214, %v554, 0
        %705 = vmatprep.subr.mxu0 0.0
        %706 = vmatpush1.msra.mxu0 %v180
        %707 = vmatprep.subr.mxu0 0.0
        %708 = vmatpush1.msra.mxu0 %v181
        %709 = vmatprep.subr.mxu0 0.0
        %710 = vmatpush1.msra.mxu0 0.0
        %711 = vmatprep.subr.mxu0 0.0
        %712 = vmatpush1.msra.mxu0 0.0
        %713 = vmatprep.subr.mxu0 0.0
        %714 = vmatpush1.msra.mxu0 0.0
        %715 = vmatprep.subr.mxu0 0.0
        %716 = vmatpush1.msra.mxu0 0.0
        %717 = vmatprep.subr.mxu0 0.0
        %718 = vmatpush1.msra.mxu0 0.0
        %719 = vmatprep.subr.mxu0 0.0
        %720 = vmatpush1.msra.mxu0 0.0
        %721 = vmatprep.subr.mxu0 0.0
        %722 = vmatpush1.msra.mxu0 0.0
        %723 = vmatprep.subr.mxu0 0.0
        %724 = vmatpush1.msra.mxu0 0.0
        %725 = vmatprep.subr.mxu0 0.0
        %726 = vmatpush1.msra.mxu0 0.0
        %727 = vmatprep.subr.mxu0 0.0
        %728 = vmatpush1.msra.mxu0 0.0
        %729 = vmatprep.subr.mxu0 0.0
        %730 = vmatpush1.msra.mxu0 0.0
        %731 = vmatprep.subr.mxu0 0.0
        %732 = vmatpush1.msra.mxu0 0.0
        %733 = vmatprep.subr.mxu0 0.0
        %734 = vmatpush1.msra.mxu0 0.0
        %735 = vmatprep.subr.mxu0 0.0
        %736 = vmatpush1.msra.mxu0 0.0
        %737 = vmatprep.subr.mxu0 0.0
        %738 = vmatpush1.msra.mxu0 0.0
        %739 = vmatprep.subr.mxu0 0.0
        %740 = vmatpush1.msra.mxu0 0.0
        %741 = vmatprep.subr.mxu0 0.0
        %742 = vmatpush1.msra.mxu0 0.0
        %743 = vmatprep.subr.mxu0 0.0
        %744 = vmatpush1.msra.mxu0 0.0
        %745 = vmatprep.subr.mxu0 0.0
        %746 = vmatpush1.msra.mxu0 0.0
        %747 = vmatprep.subr.mxu0 0.0
        %748 = vmatpush1.msra.mxu0 0.0
        %749 = vmatprep.subr.mxu0 0.0
        %750 = vmatpush1.msra.mxu0 0.0
        %751 = vmatprep.subr.mxu0 0.0
        %752 = vmatpush1.msra.mxu0 0.0
        %753 = vmatprep.subr.mxu0 0.0
        %754 = vmatpush1.msra.mxu0 0.0
        %755 = vmatprep.subr.mxu0 0.0
        %756 = vmatpush1.msra.mxu0 0.0
        %757 = vmatprep.subr.mxu0 0.0
        %758 = vmatpush1.msra.mxu0 0.0
        %759 = vmatprep.subr.mxu0 0.0
        %760 = vmatpush1.msra.mxu0 0.0
        %761 = vmatprep.subr.mxu0 0.0
        %762 = vmatpush1.msra.mxu0 0.0
        %763 = vmatprep.subr.mxu0 0.0
        %764 = vmatpush1.msra.mxu0 0.0
        %765 = vmatprep.subr.mxu0 0.0
        %766 = vmatpush1.msra.mxu0 0.0
        %767 = vmatprep.subr.mxu0 0.0
        %768 = vmatpush1.msra.mxu0 0.0
        %769 = vmatprep.mubr.f32.mxu0 0.0
        %770 = vmatmul.mubr.f32.gmra.mrb[0].mxu0 %v703
        %v771 = vpop.f32.mrb[0].mxu0
        %v772 = vadd.f32 0.0, %v771
        %v773 = vpop.f32.mrb[0].mxu0
        %774 = vdwg.mxu0
        %v776 = vsel %vm214, %v555, 0
        %778 = vmatprep.subr.mxu0 0.0
        %779 = vmatpush1.msra.mxu0 %v180
        %780 = vmatprep.subr.mxu0 0.0
        %781 = vmatpush1.msra.mxu0 %v181
        %782 = vmatprep.subr.mxu0 0.0
        %783 = vmatpush1.msra.mxu0 0.0
        %784 = vmatprep.subr.mxu0 0.0
        %785 = vmatpush1.msra.mxu0 0.0
        %786 = vmatprep.subr.mxu0 0.0
        %787 = vmatpush1.msra.mxu0 0.0
        %788 = vmatprep.subr.mxu0 0.0
        %789 = vmatpush1.msra.mxu0 0.0
        %790 = vmatprep.subr.mxu0 0.0
        %791 = vmatpush1.msra.mxu0 0.0
        %792 = vmatprep.subr.mxu0 0.0
        %793 = vmatpush1.msra.mxu0 0.0
        %794 = vmatprep.subr.mxu0 0.0
        %795 = vmatpush1.msra.mxu0 0.0
        %796 = vmatprep.subr.mxu0 0.0
        %797 = vmatpush1.msra.mxu0 0.0
        %798 = vmatprep.subr.mxu0 0.0
        %799 = vmatpush1.msra.mxu0 0.0
        %800 = vmatprep.subr.mxu0 0.0
        %801 = vmatpush1.msra.mxu0 0.0
        %802 = vmatprep.subr.mxu0 0.0
        %803 = vmatpush1.msra.mxu0 0.0
        %804 = vmatprep.subr.mxu0 0.0
        %805 = vmatpush1.msra.mxu0 0.0
        %806 = vmatprep.subr.mxu0 0.0
        %807 = vmatpush1.msra.mxu0 0.0
        %808 = vmatprep.subr.mxu0 0.0
        %809 = vmatpush1.msra.mxu0 0.0
        %810 = vmatprep.subr.mxu0 0.0
        %811 = vmatpush1.msra.mxu0 0.0
        %812 = vmatprep.subr.mxu0 0.0
        %813 = vmatpush1.msra.mxu0 0.0
        %814 = vmatprep.subr.mxu0 0.0
        %815 = vmatpush1.msra.mxu0 0.0
        %816 = vmatprep.subr.mxu0 0.0
        %817 = vmatpush1.msra.mxu0 0.0
        %818 = vmatprep.subr.mxu0 0.0
        %819 = vmatpush1.msra.mxu0 0.0
        %820 = vmatprep.subr.mxu0 0.0
        %821 = vmatpush1.msra.mxu0 0.0
        %822 = vmatprep.subr.mxu0 0.0
        %823 = vmatpush1.msra.mxu0 0.0
        %824 = vmatprep.subr.mxu0 0.0
        %825 = vmatpush1.msra.mxu0 0.0
        %826 = vmatprep.subr.mxu0 0.0
        %827 = vmatpush1.msra.mxu0 0.0
        %828 = vmatprep.subr.mxu0 0.0
        %829 = vmatpush1.msra.mxu0 0.0
        %830 = vmatprep.subr.mxu0 0.0
        %831 = vmatpush1.msra.mxu0 0.0
        %832 = vmatprep.subr.mxu0 0.0
        %833 = vmatpush1.msra.mxu0 0.0
        %834 = vmatprep.subr.mxu0 0.0
        %835 = vmatpush1.msra.mxu0 0.0
        %836 = vmatprep.subr.mxu0 0.0
        %837 = vmatpush1.msra.mxu0 0.0
        %838 = vmatprep.subr.mxu0 0.0
        %839 = vmatpush1.msra.mxu0 0.0
        %840 = vmatprep.subr.mxu0 0.0
        %841 = vmatpush1.msra.mxu0 0.0
        %842 = vmatprep.mubr.f32.mxu0 0.0
        %843 = vmatmul.mubr.f32.gmra.mrb[0].mxu0 %v776
        %v844 = vpop.f32.mrb[0].mxu0
        %v845 = vadd.f32 0.0, %v844
        %v846 = vpop.f32.mrb[0].mxu0
        %847 = vdwg.mxu0
        %848 = vst.msk [vmem:[%s177 + $0x1] sm:$0x1] %vm507, %v626
        %849 = vst.msk [vmem:[%s177 + $0x11] sm:$0x1] %vm507, %v699
        %850 = vst.msk [vmem:[%s177 + $0x21] sm:$0x1] %vm507, %v772
        %851 = vst.msk [vmem:[%s177 + $0x31] sm:$0x1] %vm507, %v845
        %v852 = vld [vmem:[%s153 + $0xc] sm:$0x1]
        %v853 = vld [vmem:[%s153 + $0x1c] sm:$0x1]
        %v854 = vld [vmem:[%s153 + $0x2c] sm:$0x1]
        %v855 = vld [vmem:[%s153 + $0x3c] sm:$0x1]
        %v856 = vmul.f32 %v852, 0.13619371
        %v857 = vmul.f32 %v853, 0.13619371
        %v858 = vmul.f32 %v854, 0.13619371
        %v859 = vmul.f32 %v855, 0.13619371
        %v860 = vld [vmem:[%s153 + $0xd] sm:$0x1]
        %v861 = vld [vmem:[%s153 + $0x1d] sm:$0x1]
        %v862 = vld [vmem:[%s153 + $0x2d] sm:$0x1]
        %v863 = vld [vmem:[%s153 + $0x3d] sm:$0x1]
        %v864 = vmul.f32 %v860, 0.22824785
        %v865 = vmul.f32 %v861, 0.22824785
        %v866 = vmul.f32 %v862, 0.22824785
        %v867 = vmul.f32 %v863, 0.22824785
        %v868 = vadd.f32 %v856, %v864
        %v869 = vadd.f32 %v857, %v865
        %v870 = vadd.f32 %v858, %v866
        %v871 = vadd.f32 %v859, %v867
        %v872 = vld [vmem:[%s153 + $0xe] sm:$0x1]
        %v873 = vld [vmem:[%s153 + $0x1e] sm:$0x1]
        %v874 = vld [vmem:[%s153 + $0x2e] sm:$0x1]
        %v875 = vld [vmem:[%s153 + $0x3e] sm:$0x1]
        %v876 = vmul.f32 %v872, 0.4073106
        %v877 = vmul.f32 %v873, 0.4073106
        %v878 = vmul.f32 %v874, 0.4073106
        %v879 = vmul.f32 %v875, 0.4073106
        %v880 = vadd.f32 %v868, %v876
        %v881 = vadd.f32 %v869, %v877
        %v882 = vadd.f32 %v870, %v878
        %v883 = vadd.f32 %v871, %v879
        %v884 = vld [vmem:[%s153 + $0xf] sm:$0x1]
        %v885 = vld [vmem:[%s153 + $0x1f] sm:$0x1]
        %v886 = vld [vmem:[%s153 + $0x2f] sm:$0x1]
        %v887 = vld [vmem:[%s153 + $0x3f] sm:$0x1]
        %v888 = vmul.f32 %v884, 0.22824785
        %v889 = vmul.f32 %v885, 0.22824785
        %v890 = vmul.f32 %v886, 0.22824785
        %v891 = vmul.f32 %v887, 0.22824785
        %v892 = vadd.f32 %v880, %v888
        %v893 = vadd.f32 %v881, %v889
        %v894 = vadd.f32 %v882, %v890
        %v895 = vadd.f32 %v883, %v891
        %v897 = vsel %vm214, %v892, 0
        %899 = vmatprep.subr.mxu0 0.0
        %900 = vmatpush1.msra.mxu0 %v180
        %901 = vmatprep.subr.mxu0 0.0
        %902 = vmatpush1.msra.mxu0 %v181
        %903 = vmatprep.subr.mxu0 0.0
        %904 = vmatpush1.msra.mxu0 0.0
        %905 = vmatprep.subr.mxu0 0.0
        %906 = vmatpush1.msra.mxu0 0.0
        %907 = vmatprep.subr.mxu0 0.0
        %908 = vmatpush1.msra.mxu0 0.0
        %909 = vmatprep.subr.mxu0 0.0
        %910 = vmatpush1.msra.mxu0 0.0
        %911 = vmatprep.subr.mxu0 0.0
        %912 = vmatpush1.msra.mxu0 0.0
        %913 = vmatprep.subr.mxu0 0.0
        %914 = vmatpush1.msra.mxu0 0.0
        %915 = vmatprep.subr.mxu0 0.0
        %916 = vmatpush1.msra.mxu0 0.0
        %917 = vmatprep.subr.mxu0 0.0
        %918 = vmatpush1.msra.mxu0 0.0
        %919 = vmatprep.subr.mxu0 0.0
        %920 = vmatpush1.msra.mxu0 0.0
        %921 = vmatprep.subr.mxu0 0.0
        %922 = vmatpush1.msra.mxu0 0.0
        %923 = vmatprep.subr.mxu0 0.0
        %924 = vmatpush1.msra.mxu0 0.0
        %925 = vmatprep.subr.mxu0 0.0
        %926 = vmatpush1.msra.mxu0 0.0
        %927 = vmatprep.subr.mxu0 0.0
        %928 = vmatpush1.msra.mxu0 0.0
        %929 = vmatprep.subr.mxu0 0.0
        %930 = vmatpush1.msra.mxu0 0.0
        %931 = vmatprep.subr.mxu0 0.0
        %932 = vmatpush1.msra.mxu0 0.0
        %933 = vmatprep.subr.mxu0 0.0
        %934 = vmatpush1.msra.mxu0 0.0
        %935 = vmatprep.subr.mxu0 0.0
        %936 = vmatpush1.msra.mxu0 0.0
        %937 = vmatprep.subr.mxu0 0.0
        %938 = vmatpush1.msra.mxu0 0.0
        %939 = vmatprep.subr.mxu0 0.0
        %940 = vmatpush1.msra.mxu0 0.0
        %941 = vmatprep.subr.mxu0 0.0
        %942 = vmatpush1.msra.mxu0 0.0
        %943 = vmatprep.subr.mxu0 0.0
        %944 = vmatpush1.msra.mxu0 0.0
        %945 = vmatprep.subr.mxu0 0.0
        %946 = vmatpush1.msra.mxu0 0.0
        %947 = vmatprep.subr.mxu0 0.0
        %948 = vmatpush1.msra.mxu0 0.0
        %949 = vmatprep.subr.mxu0 0.0
        %950 = vmatpush1.msra.mxu0 0.0
        %951 = vmatprep.subr.mxu0 0.0
        %952 = vmatpush1.msra.mxu0 0.0
        %953 = vmatprep.subr.mxu0 0.0
        %954 = vmatpush1.msra.mxu0 0.0
        %955 = vmatprep.subr.mxu0 0.0
        %956 = vmatpush1.msra.mxu0 0.0
        %957 = vmatprep.subr.mxu0 0.0
        %958 = vmatpush1.msra.mxu0 0.0
        %959 = vmatprep.subr.mxu0 0.0
        %960 = vmatpush1.msra.mxu0 0.0
        %961 = vmatprep.subr.mxu0 0.0
        %962 = vmatpush1.msra.mxu0 0.0
        %963 = vmatprep.mubr.f32.mxu0 0.0
        %964 = vmatmul.mubr.f32.gmra.mrb[0].mxu0 %v897
        %v965 = vpop.f32.mrb[0].mxu0
        %v966 = vadd.f32 0.0, %v965
        %v967 = vpop.f32.mrb[0].mxu0
        %968 = vdwg.mxu0
        %v970 = vsel %vm214, %v893, 0
        %972 = vmatprep.subr.mxu0 0.0
        %973 = vmatpush1.msra.mxu0 %v180
        %974 = vmatprep.subr.mxu0 0.0
        %975 = vmatpush1.msra.mxu0 %v181
        %976 = vmatprep.subr.mxu0 0.0
        %977 = vmatpush1.msra.mxu0 0.0
        %978 = vmatprep.subr.mxu0 0.0
        %979 = vmatpush1.msra.mxu0 0.0
        %980 = vmatprep.subr.mxu0 0.0
        %981 = vmatpush1.msra.mxu0 0.0
        %982 = vmatprep.subr.mxu0 0.0
        %983 = vmatpush1.msra.mxu0 0.0
        %984 = vmatprep.subr.mxu0 0.0
        %985 = vmatpush1.msra.mxu0 0.0
        %986 = vmatprep.subr.mxu0 0.0
        %987 = vmatpush1.msra.mxu0 0.0
        %988 = vmatprep.subr.mxu0 0.0
        %989 = vmatpush1.msra.mxu0 0.0
        %990 = vmatprep.subr.mxu0 0.0
        %991 = vmatpush1.msra.mxu0 0.0
        %992 = vmatprep.subr.mxu0 0.0
        %993 = vmatpush1.msra.mxu0 0.0
        %994 = vmatprep.subr.mxu0 0.0
        %995 = vmatpush1.msra.mxu0 0.0
        %996 = vmatprep.subr.mxu0 0.0
        %997 = vmatpush1.msra.mxu0 0.0
        %998 = vmatprep.subr.mxu0 0.0
        %999 = vmatpush1.msra.mxu0 0.0
        %1000 = vmatprep.subr.mxu0 0.0
        %1001 = vmatpush1.msra.mxu0 0.0
        %1002 = vmatprep.subr.mxu0 0.0
        %1003 = vmatpush1.msra.mxu0 0.0
        %1004 = vmatprep.subr.mxu0 0.0
        %1005 = vmatpush1.msra.mxu0 0.0
        %1006 = vmatprep.subr.mxu0 0.0
        %1007 = vmatpush1.msra.mxu0 0.0
        %1008 = vmatprep.subr.mxu0 0.0
        %1009 = vmatpush1.msra.mxu0 0.0
        %1010 = vmatprep.subr.mxu0 0.0
        %1011 = vmatpush1.msra.mxu0 0.0
        %1012 = vmatprep.subr.mxu0 0.0
        %1013 = vmatpush1.msra.mxu0 0.0
        %1014 = vmatprep.subr.mxu0 0.0
        %1015 = vmatpush1.msra.mxu0 0.0
        %1016 = vmatprep.subr.mxu0 0.0
        %1017 = vmatpush1.msra.mxu0 0.0
        %1018 = vmatprep.subr.mxu0 0.0
        %1019 = vmatpush1.msra.mxu0 0.0
        %1020 = vmatprep.subr.mxu0 0.0
        %1021 = vmatpush1.msra.mxu0 0.0
        %1022 = vmatprep.subr.mxu0 0.0
        %1023 = vmatpush1.msra.mxu0 0.0
        %1024 = vmatprep.subr.mxu0 0.0
        %1025 = vmatpush1.msra.mxu0 0.0
        %1026 = vmatprep.subr.mxu0 0.0
        %1027 = vmatpush1.msra.mxu0 0.0
        %1028 = vmatprep.subr.mxu0 0.0
        %1029 = vmatpush1.msra.mxu0 0.0
        %1030 = vmatprep.subr.mxu0 0.0
        %1031 = vmatpush1.msra.mxu0 0.0
        %1032 = vmatprep.subr.mxu0 0.0
        %1033 = vmatpush1.msra.mxu0 0.0
        %1034 = vmatprep.subr.mxu0 0.0
        %1035 = vmatpush1.msra.mxu0 0.0
        %1036 = vmatprep.mubr.f32.mxu0 0.0
        %1037 = vmatmul.mubr.f32.gmra.mrb[0].mxu0 %v970
        %v1038 = vpop.f32.mrb[0].mxu0
        %v1039 = vadd.f32 0.0, %v1038
        %v1040 = vpop.f32.mrb[0].mxu0
        %1041 = vdwg.mxu0
        %v1043 = vsel %vm214, %v894, 0
        %1045 = vmatprep.subr.mxu0 0.0
        %1046 = vmatpush1.msra.mxu0 %v180
        %1047 = vmatprep.subr.mxu0 0.0
        %1048 = vmatpush1.msra.mxu0 %v181
        %1049 = vmatprep.subr.mxu0 0.0
        %1050 = vmatpush1.msra.mxu0 0.0
        %1051 = vmatprep.subr.mxu0 0.0
        %1052 = vmatpush1.msra.mxu0 0.0
        %1053 = vmatprep.subr.mxu0 0.0
        %1054 = vmatpush1.msra.mxu0 0.0
        %1055 = vmatprep.subr.mxu0 0.0
        %1056 = vmatpush1.msra.mxu0 0.0
        %1057 = vmatprep.subr.mxu0 0.0
        %1058 = vmatpush1.msra.mxu0 0.0
        %1059 = vmatprep.subr.mxu0 0.0
        %1060 = vmatpush1.msra.mxu0 0.0
        %1061 = vmatprep.subr.mxu0 0.0
        %1062 = vmatpush1.msra.mxu0 0.0
        %1063 = vmatprep.subr.mxu0 0.0
        %1064 = vmatpush1.msra.mxu0 0.0
        %1065 = vmatprep.subr.mxu0 0.0
        %1066 = vmatpush1.msra.mxu0 0.0
        %1067 = vmatprep.subr.mxu0 0.0
        %1068 = vmatpush1.msra.mxu0 0.0
        %1069 = vmatprep.subr.mxu0 0.0
        %1070 = vmatpush1.msra.mxu0 0.0
        %1071 = vmatprep.subr.mxu0 0.0
        %1072 = vmatpush1.msra.mxu0 0.0
        %1073 = vmatprep.subr.mxu0 0.0
        %1074 = vmatpush1.msra.mxu0 0.0
        %1075 = vmatprep.subr.mxu0 0.0
        %1076 = vmatpush1.msra.mxu0 0.0
        %1077 = vmatprep.subr.mxu0 0.0
        %1078 = vmatpush1.msra.mxu0 0.0
        %1079 = vmatprep.subr.mxu0 0.0
        %1080 = vmatpush1.msra.mxu0 0.0
        %1081 = vmatprep.subr.mxu0 0.0
        %1082 = vmatpush1.msra.mxu0 0.0
        %1083 = vmatprep.subr.mxu0 0.0
        %1084 = vmatpush1.msra.mxu0 0.0
        %1085 = vmatprep.subr.mxu0 0.0
        %1086 = vmatpush1.msra.mxu0 0.0
        %1087 = vmatprep.subr.mxu0 0.0
        %1088 = vmatpush1.msra.mxu0 0.0
        %1089 = vmatprep.subr.mxu0 0.0
        %1090 = vmatpush1.msra.mxu0 0.0
        %1091 = vmatprep.subr.mxu0 0.0
        %1092 = vmatpush1.msra.mxu0 0.0
        %1093 = vmatprep.subr.mxu0 0.0
        %1094 = vmatpush1.msra.mxu0 0.0
        %1095 = vmatprep.subr.mxu0 0.0
        %1096 = vmatpush1.msra.mxu0 0.0
        %1097 = vmatprep.subr.mxu0 0.0
        %1098 = vmatpush1.msra.mxu0 0.0
        %1099 = vmatprep.subr.mxu0 0.0
        %1100 = vmatpush1.msra.mxu0 0.0
        %1101 = vmatprep.subr.mxu0 0.0
        %1102 = vmatpush1.msra.mxu0 0.0
        %1103 = vmatprep.subr.mxu0 0.0
        %1104 = vmatpush1.msra.mxu0 0.0
        %1105 = vmatprep.subr.mxu0 0.0
        %1106 = vmatpush1.msra.mxu0 0.0
        %1107 = vmatprep.subr.mxu0 0.0
        %1108 = vmatpush1.msra.mxu0 0.0
        %1109 = vmatprep.mubr.f32.mxu0 0.0
        %1110 = vmatmul.mubr.f32.gmra.mrb[0].mxu0 %v1043
        %v1111 = vpop.f32.mrb[0].mxu0
        %v1112 = vadd.f32 0.0, %v1111
        %v1113 = vpop.f32.mrb[0].mxu0
        %1114 = vdwg.mxu0
        %v1116 = vsel %vm214, %v895, 0
        %1118 = vmatprep.subr.mxu0 0.0
        %1119 = vmatpush1.msra.mxu0 %v180
        %1120 = vmatprep.subr.mxu0 0.0
        %1121 = vmatpush1.msra.mxu0 %v181
        %1122 = vmatprep.subr.mxu0 0.0
        %1123 = vmatpush1.msra.mxu0 0.0
        %1124 = vmatprep.subr.mxu0 0.0
        %1125 = vmatpush1.msra.mxu0 0.0
        %1126 = vmatprep.subr.mxu0 0.0
        %1127 = vmatpush1.msra.mxu0 0.0
        %1128 = vmatprep.subr.mxu0 0.0
        %1129 = vmatpush1.msra.mxu0 0.0
        %1130 = vmatprep.subr.mxu0 0.0
        %1131 = vmatpush1.msra.mxu0 0.0
        %1132 = vmatprep.subr.mxu0 0.0
        %1133 = vmatpush1.msra.mxu0 0.0
        %1134 = vmatprep.subr.mxu0 0.0
        %1135 = vmatpush1.msra.mxu0 0.0
        %1136 = vmatprep.subr.mxu0 0.0
        %1137 = vmatpush1.msra.mxu0 0.0
        %1138 = vmatprep.subr.mxu0 0.0
        %1139 = vmatpush1.msra.mxu0 0.0
        %1140 = vmatprep.subr.mxu0 0.0
        %1141 = vmatpush1.msra.mxu0 0.0
        %1142 = vmatprep.subr.mxu0 0.0
        %1143 = vmatpush1.msra.mxu0 0.0
        %1144 = vmatprep.subr.mxu0 0.0
        %1145 = vmatpush1.msra.mxu0 0.0
        %1146 = vmatprep.subr.mxu0 0.0
        %1147 = vmatpush1.msra.mxu0 0.0
        %1148 = vmatprep.subr.mxu0 0.0
        %1149 = vmatpush1.msra.mxu0 0.0
        %1150 = vmatprep.subr.mxu0 0.0
        %1151 = vmatpush1.msra.mxu0 0.0
        %1152 = vmatprep.subr.mxu0 0.0
        %1153 = vmatpush1.msra.mxu0 0.0
        %1154 = vmatprep.subr.mxu0 0.0
        %1155 = vmatpush1.msra.mxu0 0.0
        %1156 = vmatprep.subr.mxu0 0.0
        %1157 = vmatpush1.msra.mxu0 0.0
        %1158 = vmatprep.subr.mxu0 0.0
        %1159 = vmatpush1.msra.mxu0 0.0
        %1160 = vmatprep.subr.mxu0 0.0
        %1161 = vmatpush1.msra.mxu0 0.0
        %1162 = vmatprep.subr.mxu0 0.0
        %1163 = vmatpush1.msra.mxu0 0.0
        %1164 = vmatprep.subr.mxu0 0.0
        %1165 = vmatpush1.msra.mxu0 0.0
        %1166 = vmatprep.subr.mxu0 0.0
        %1167 = vmatpush1.msra.mxu0 0.0
        %1168 = vmatprep.subr.mxu0 0.0
        %1169 = vmatpush1.msra.mxu0 0.0
        %1170 = vmatprep.subr.mxu0 0.0
        %1171 = vmatpush1.msra.mxu0 0.0
        %1172 = vmatprep.subr.mxu0 0.0
        %1173 = vmatpush1.msra.mxu0 0.0
        %1174 = vmatprep.subr.mxu0 0.0
        %1175 = vmatpush1.msra.mxu0 0.0
        %1176 = vmatprep.subr.mxu0 0.0
        %1177 = vmatpush1.msra.mxu0 0.0
        %1178 = vmatprep.subr.mxu0 0.0
        %1179 = vmatpush1.msra.mxu0 0.0
        %1180 = vmatprep.subr.mxu0 0.0
        %1181 = vmatpush1.msra.mxu0 0.0
        %1182 = vmatprep.mubr.f32.mxu0 0.0
        %1183 = vmatmul.mubr.f32.gmra.mrb[0].mxu0 %v1116
        %v1184 = vpop.f32.mrb[0].mxu0
        %v1185 = vadd.f32 0.0, %v1184
        %v1186 = vpop.f32.mrb[0].mxu0
        %1187 = vdwg.mxu0
        %1188 = vst.msk [vmem:[%s177 + $0xe] sm:$0x1] %vm507, %v966
        %1189 = vst.msk [vmem:[%s177 + $0x1e] sm:$0x1] %vm507, %v1039
        %1190 = vst.msk [vmem:[%s177 + $0x2e] sm:$0x1] %vm507, %v1112
        %1191 = vst.msk [vmem:[%s177 + $0x3e] sm:$0x1] %vm507, %v1185
        %v1192 = vld [vmem:[%s153 + $0xd] sm:$0x1]
        %v1193 = vld [vmem:[%s153 + $0x1d] sm:$0x1]
        %v1194 = vld [vmem:[%s153 + $0x2d] sm:$0x1]
        %v1195 = vld [vmem:[%s153 + $0x3d] sm:$0x1]
        %v1196 = vmul.f32 %v1192, 0.27238742
        %v1197 = vmul.f32 %v1193, 0.27238742
        %v1198 = vmul.f32 %v1194, 0.27238742
        %v1199 = vmul.f32 %v1195, 0.27238742
        %v1200 = vld [vmem:[%s153 + $0xe] sm:$0x1]
        %v1201 = vld [vmem:[%s153 + $0x1e] sm:$0x1]
        %v1202 = vld [vmem:[%s153 + $0x2e] sm:$0x1]
        %v1203 = vld [vmem:[%s153 + $0x3e] sm:$0x1]
        %v1204 = vmul.f32 %v1200, 0.4564957
        %v1205 = vmul.f32 %v1201, 0.4564957
        %v1206 = vmul.f32 %v1202, 0.4564957
        %v1207 = vmul.f32 %v1203, 0.4564957
        %v1208 = vadd.f32 %v1196, %v1204
        %v1209 = vadd.f32 %v1197, %v1205
        %v1210 = vadd.f32 %v1198, %v1206
        %v1211 = vadd.f32 %v1199, %v1207
        %v1212 = vld [vmem:[%s153 + $0xf] sm:$0x1]
        %v1213 = vld [vmem:[%s153 + $0x1f] sm:$0x1]
        %v1214 = vld [vmem:[%s153 + $0x2f] sm:$0x1]
        %v1215 = vld [vmem:[%s153 + $0x3f] sm:$0x1]
        %v1216 = vmul.f32 %v1212, 0.27111688
        %v1217 = vmul.f32 %v1213, 0.27111688
        %v1218 = vmul.f32 %v1214, 0.27111688
        %v1219 = vmul.f32 %v1215, 0.27111688
        %v1220 = vadd.f32 %v1208, %v1216
        %v1221 = vadd.f32 %v1209, %v1217
        %v1222 = vadd.f32 %v1210, %v1218
        %v1223 = vadd.f32 %v1211, %v1219
        %v1225 = vsel %vm214, %v1220, 0
        %1227 = vmatprep.subr.mxu0 0.0
        %1228 = vmatpush1.msra.mxu0 %v180
        %1229 = vmatprep.subr.mxu0 0.0
        %1230 = vmatpush1.msra.mxu0 %v181
        %1231 = vmatprep.subr.mxu0 0.0
        %1232 = vmatpush1.msra.mxu0 0.0
        %1233 = vmatprep.subr.mxu0 0.0
        %1234 = vmatpush1.msra.mxu0 0.0
        %1235 = vmatprep.subr.mxu0 0.0
        %1236 = vmatpush1.msra.mxu0 0.0
        %1237 = vmatprep.subr.mxu0 0.0
        %1238 = vmatpush1.msra.mxu0 0.0
        %1239 = vmatprep.subr.mxu0 0.0
        %1240 = vmatpush1.msra.mxu0 0.0
        %1241 = vmatprep.subr.mxu0 0.0
        %1242 = vmatpush1.msra.mxu0 0.0
        %1243 = vmatprep.subr.mxu0 0.0
        %1244 = vmatpush1.msra.mxu0 0.0
        %1245 = vmatprep.subr.mxu0 0.0
        %1246 = vmatpush1.msra.mxu0 0.0
        %1247 = vmatprep.subr.mxu0 0.0
        %1248 = vmatpush1.msra.mxu0 0.0
        %1249 = vmatprep.subr.mxu0 0.0
        %1250 = vmatpush1.msra.mxu0 0.0
        %1251 = vmatprep.subr.mxu0 0.0
        %1252 = vmatpush1.msra.mxu0 0.0
        %1253 = vmatprep.subr.mxu0 0.0
        %1254 = vmatpush1.msra.mxu0 0.0
        %1255 = vmatprep.subr.mxu0 0.0
        %1256 = vmatpush1.msra.mxu0 0.0
        %1257 = vmatprep.subr.mxu0 0.0
        %1258 = vmatpush1.msra.mxu0 0.0
        %1259 = vmatprep.subr.mxu0 0.0
        %1260 = vmatpush1.msra.mxu0 0.0
        %1261 = vmatprep.subr.mxu0 0.0
        %1262 = vmatpush1.msra.mxu0 0.0
        %1263 = vmatprep.subr.mxu0 0.0
        %1264 = vmatpush1.msra.mxu0 0.0
        %1265 = vmatprep.subr.mxu0 0.0
        %1266 = vmatpush1.msra.mxu0 0.0
        %1267 = vmatprep.subr.mxu0 0.0
        %1268 = vmatpush1.msra.mxu0 0.0
        %1269 = vmatprep.subr.mxu0 0.0
        %1270 = vmatpush1.msra.mxu0 0.0
        %1271 = vmatprep.subr.mxu0 0.0
        %1272 = vmatpush1.msra.mxu0 0.0
        %1273 = vmatprep.subr.mxu0 0.0
        %1274 = vmatpush1.msra.mxu0 0.0
        %1275 = vmatprep.subr.mxu0 0.0
        %1276 = vmatpush1.msra.mxu0 0.0
        %1277 = vmatprep.subr.mxu0 0.0
        %1278 = vmatpush1.msra.mxu0 0.0
        %1279 = vmatprep.subr.mxu0 0.0
        %1280 = vmatpush1.msra.mxu0 0.0
        %1281 = vmatprep.subr.mxu0 0.0
        %1282 = vmatpush1.msra.mxu0 0.0
        %1283 = vmatprep.subr.mxu0 0.0
        %1284 = vmatpush1.msra.mxu0 0.0
        %1285 = vmatprep.subr.mxu0 0.0
        %1286 = vmatpush1.msra.mxu0 0.0
        %1287 = vmatprep.subr.mxu0 0.0
        %1288 = vmatpush1.msra.mxu0 0.0
        %1289 = vmatprep.subr.mxu0 0.0
        %1290 = vmatpush1.msra.mxu0 0.0
        %1291 = vmatprep.mubr.f32.mxu0 0.0
        %1292 = vmatmul.mubr.f32.gmra.mrb[0].mxu0 %v1225
        %v1293 = vpop.f32.mrb[0].mxu0
        %v1294 = vadd.f32 0.0, %v1293
        %v1295 = vpop.f32.mrb[0].mxu0
        %1296 = vdwg.mxu0
        %v1298 = vsel %vm214, %v1221, 0
        %1300 = vmatprep.subr.mxu0 0.0
        %1301 = vmatpush1.msra.mxu0 %v180
        %1302 = vmatprep.subr.mxu0 0.0
        %1303 = vmatpush1.msra.mxu0 %v181
        %1304 = vmatprep.subr.mxu0 0.0
        %1305 = vmatpush1.msra.mxu0 0.0
        %1306 = vmatprep.subr.mxu0 0.0
        %1307 = vmatpush1.msra.mxu0 0.0
        %1308 = vmatprep.subr.mxu0 0.0
        %1309 = vmatpush1.msra.mxu0 0.0
        %1310 = vmatprep.subr.mxu0 0.0
        %1311 = vmatpush1.msra.mxu0 0.0
        %1312 = vmatprep.subr.mxu0 0.0
        %1313 = vmatpush1.msra.mxu0 0.0
        %1314 = vmatprep.subr.mxu0 0.0
        %1315 = vmatpush1.msra.mxu0 0.0
        %1316 = vmatprep.subr.mxu0 0.0
        %1317 = vmatpush1.msra.mxu0 0.0
        %1318 = vmatprep.subr.mxu0 0.0
        %1319 = vmatpush1.msra.mxu0 0.0
        %1320 = vmatprep.subr.mxu0 0.0
        %1321 = vmatpush1.msra.mxu0 0.0
        %1322 = vmatprep.subr.mxu0 0.0
        %1323 = vmatpush1.msra.mxu0 0.0
        %1324 = vmatprep.subr.mxu0 0.0
        %1325 = vmatpush1.msra.mxu0 0.0
        %1326 = vmatprep.subr.mxu0 0.0
        %1327 = vmatpush1.msra.mxu0 0.0
        %1328 = vmatprep.subr.mxu0 0.0
        %1329 = vmatpush1.msra.mxu0 0.0
        %1330 = vmatprep.subr.mxu0 0.0
        %1331 = vmatpush1.msra.mxu0 0.0
        %1332 = vmatprep.subr.mxu0 0.0
        %1333 = vmatpush1.msra.mxu0 0.0
        %1334 = vmatprep.subr.mxu0 0.0
        %1335 = vmatpush1.msra.mxu0 0.0
        %1336 = vmatprep.subr.mxu0 0.0
        %1337 = vmatpush1.msra.mxu0 0.0
        %1338 = vmatprep.subr.mxu0 0.0
        %1339 = vmatpush1.msra.mxu0 0.0
        %1340 = vmatprep.subr.mxu0 0.0
        %1341 = vmatpush1.msra.mxu0 0.0
        %1342 = vmatprep.subr.mxu0 0.0
        %1343 = vmatpush1.msra.mxu0 0.0
        %1344 = vmatprep.subr.mxu0 0.0
        %1345 = vmatpush1.msra.mxu0 0.0
        %1346 = vmatprep.subr.mxu0 0.0
        %1347 = vmatpush1.msra.mxu0 0.0
        %1348 = vmatprep.subr.mxu0 0.0
        %1349 = vmatpush1.msra.mxu0 0.0
        %1350 = vmatprep.subr.mxu0 0.0
        %1351 = vmatpush1.msra.mxu0 0.0
        %1352 = vmatprep.subr.mxu0 0.0
        %1353 = vmatpush1.msra.mxu0 0.0
        %1354 = vmatprep.subr.mxu0 0.0
        %1355 = vmatpush1.msra.mxu0 0.0
        %1356 = vmatprep.subr.mxu0 0.0
        %1357 = vmatpush1.msra.mxu0 0.0
        %1358 = vmatprep.subr.mxu0 0.0
        %1359 = vmatpush1.msra.mxu0 0.0
        %1360 = vmatprep.subr.mxu0 0.0
        %1361 = vmatpush1.msra.mxu0 0.0
        %1362 = vmatprep.subr.mxu0 0.0
        %1363 = vmatpush1.msra.mxu0 0.0
        %1364 = vmatprep.mubr.f32.mxu0 0.0
        %1365 = vmatmul.mubr.f32.gmra.mrb[0].mxu0 %v1298
        %v1366 = vpop.f32.mrb[0].mxu0
        %v1367 = vadd.f32 0.0, %v1366
        %v1368 = vpop.f32.mrb[0].mxu0
        %1369 = vdwg.mxu0
        %v1371 = vsel %vm214, %v1222, 0
        %1373 = vmatprep.subr.mxu0 0.0
        %1374 = vmatpush1.msra.mxu0 %v180
        %1375 = vmatprep.subr.mxu0 0.0
        %1376 = vmatpush1.msra.mxu0 %v181
        %1377 = vmatprep.subr.mxu0 0.0
        %1378 = vmatpush1.msra.mxu0 0.0
        %1379 = vmatprep.subr.mxu0 0.0
        %1380 = vmatpush1.msra.mxu0 0.0
        %1381 = vmatprep.subr.mxu0 0.0
        %1382 = vmatpush1.msra.mxu0 0.0
        %1383 = vmatprep.subr.mxu0 0.0
        %1384 = vmatpush1.msra.mxu0 0.0
        %1385 = vmatprep.subr.mxu0 0.0
        %1386 = vmatpush1.msra.mxu0 0.0
        %1387 = vmatprep.subr.mxu0 0.0
        %1388 = vmatpush1.msra.mxu0 0.0
        %1389 = vmatprep.subr.mxu0 0.0
        %1390 = vmatpush1.msra.mxu0 0.0
        %1391 = vmatprep.subr.mxu0 0.0
        %1392 = vmatpush1.msra.mxu0 0.0
        %1393 = vmatprep.subr.mxu0 0.0
        %1394 = vmatpush1.msra.mxu0 0.0
        %1395 = vmatprep.subr.mxu0 0.0
        %1396 = vmatpush1.msra.mxu0 0.0
        %1397 = vmatprep.subr.mxu0 0.0
        %1398 = vmatpush1.msra.mxu0 0.0
        %1399 = vmatprep.subr.mxu0 0.0
        %1400 = vmatpush1.msra.mxu0 0.0
        %1401 = vmatprep.subr.mxu0 0.0
        %1402 = vmatpush1.msra.mxu0 0.0
        %1403 = vmatprep.subr.mxu0 0.0
        %1404 = vmatpush1.msra.mxu0 0.0
        %1405 = vmatprep.subr.mxu0 0.0
        %1406 = vmatpush1.msra.mxu0 0.0
        %1407 = vmatprep.subr.mxu0 0.0
        %1408 = vmatpush1.msra.mxu0 0.0
        %1409 = vmatprep.subr.mxu0 0.0
        %1410 = vmatpush1.msra.mxu0 0.0
        %1411 = vmatprep.subr.mxu0 0.0
        %1412 = vmatpush1.msra.mxu0 0.0
        %1413 = vmatprep.subr.mxu0 0.0
        %1414 = vmatpush1.msra.mxu0 0.0
        %1415 = vmatprep.subr.mxu0 0.0
        %1416 = vmatpush1.msra.mxu0 0.0
        %1417 = vmatprep.subr.mxu0 0.0
        %1418 = vmatpush1.msra.mxu0 0.0
        %1419 = vmatprep.subr.mxu0 0.0
        %1420 = vmatpush1.msra.mxu0 0.0
        %1421 = vmatprep.subr.mxu0 0.0
        %1422 = vmatpush1.msra.mxu0 0.0
        %1423 = vmatprep.subr.mxu0 0.0
        %1424 = vmatpush1.msra.mxu0 0.0
        %1425 = vmatprep.subr.mxu0 0.0
        %1426 = vmatpush1.msra.mxu0 0.0
        %1427 = vmatprep.subr.mxu0 0.0
        %1428 = vmatpush1.msra.mxu0 0.0
        %1429 = vmatprep.subr.mxu0 0.0
        %1430 = vmatpush1.msra.mxu0 0.0
        %1431 = vmatprep.subr.mxu0 0.0
        %1432 = vmatpush1.msra.mxu0 0.0
        %1433 = vmatprep.subr.mxu0 0.0
        %1434 = vmatpush1.msra.mxu0 0.0
        %1435 = vmatprep.subr.mxu0 0.0
        %1436 = vmatpush1.msra.mxu0 0.0
        %1437 = vmatprep.mubr.f32.mxu0 0.0
        %1438 = vmatmul.mubr.f32.gmra.mrb[0].mxu0 %v1371
        %v1439 = vpop.f32.mrb[0].mxu0
        %v1440 = vadd.f32 0.0, %v1439
        %v1441 = vpop.f32.mrb[0].mxu0
        %1442 = vdwg.mxu0
        %v1444 = vsel %vm214, %v1223, 0
        %1446 = vmatprep.subr.mxu0 0.0
        %1447 = vmatpush1.msra.mxu0 %v180
        %1448 = vmatprep.subr.mxu0 0.0
        %1449 = vmatpush1.msra.mxu0 %v181
        %1450 = vmatprep.subr.mxu0 0.0
        %1451 = vmatpush1.msra.mxu0 0.0
        %1452 = vmatprep.subr.mxu0 0.0
        %1453 = vmatpush1.msra.mxu0 0.0
        %1454 = vmatprep.subr.mxu0 0.0
        %1455 = vmatpush1.msra.mxu0 0.0
        %1456 = vmatprep.subr.mxu0 0.0
        %1457 = vmatpush1.msra.mxu0 0.0
        %1458 = vmatprep.subr.mxu0 0.0
        %1459 = vmatpush1.msra.mxu0 0.0
        %1460 = vmatprep.subr.mxu0 0.0
        %1461 = vmatpush1.msra.mxu0 0.0
        %1462 = vmatprep.subr.mxu0 0.0
        %1463 = vmatpush1.msra.mxu0 0.0
        %1464 = vmatprep.subr.mxu0 0.0
        %1465 = vmatpush1.msra.mxu0 0.0
        %1466 = vmatprep.subr.mxu0 0.0
        %1467 = vmatpush1.msra.mxu0 0.0
        %1468 = vmatprep.subr.mxu0 0.0
        %1469 = vmatpush1.msra.mxu0 0.0
        %1470 = vmatprep.subr.mxu0 0.0
        %1471 = vmatpush1.msra.mxu0 0.0
        %1472 = vmatprep.subr.mxu0 0.0
        %1473 = vmatpush1.msra.mxu0 0.0
        %1474 = vmatprep.subr.mxu0 0.0
        %1475 = vmatpush1.msra.mxu0 0.0
        %1476 = vmatprep.subr.mxu0 0.0
        %1477 = vmatpush1.msra.mxu0 0.0
        %1478 = vmatprep.subr.mxu0 0.0
        %1479 = vmatpush1.msra.mxu0 0.0
        %1480 = vmatprep.subr.mxu0 0.0
        %1481 = vmatpush1.msra.mxu0 0.0
        %1482 = vmatprep.subr.mxu0 0.0
        %1483 = vmatpush1.msra.mxu0 0.0
        %1484 = vmatprep.subr.mxu0 0.0
        %1485 = vmatpush1.msra.mxu0 0.0
        %1486 = vmatprep.subr.mxu0 0.0
        %1487 = vmatpush1.msra.mxu0 0.0
        %1488 = vmatprep.subr.mxu0 0.0
        %1489 = vmatpush1.msra.mxu0 0.0
        %1490 = vmatprep.subr.mxu0 0.0
        %1491 = vmatpush1.msra.mxu0 0.0
        %1492 = vmatprep.subr.mxu0 0.0
        %1493 = vmatpush1.msra.mxu0 0.0
        %1494 = vmatprep.subr.mxu0 0.0
        %1495 = vmatpush1.msra.mxu0 0.0
        %1496 = vmatprep.subr.mxu0 0.0
        %1497 = vmatpush1.msra.mxu0 0.0
        %1498 = vmatprep.subr.mxu0 0.0
        %1499 = vmatpush1.msra.mxu0 0.0
        %1500 = vmatprep.subr.mxu0 0.0
        %1501 = vmatpush1.msra.mxu0 0.0
        %1502 = vmatprep.subr.mxu0 0.0
        %1503 = vmatpush1.msra.mxu0 0.0
        %1504 = vmatprep.subr.mxu0 0.0
        %1505 = vmatpush1.msra.mxu0 0.0
        %1506 = vmatprep.subr.mxu0 0.0
        %1507 = vmatpush1.msra.mxu0 0.0
        %1508 = vmatprep.subr.mxu0 0.0
        %1509 = vmatpush1.msra.mxu0 0.0
        %1510 = vmatprep.mubr.f32.mxu0 0.0
        %1511 = vmatmul.mubr.f32.gmra.mrb[0].mxu0 %v1444
        %v1512 = vpop.f32.mrb[0].mxu0
        %v1513 = vadd.f32 0.0, %v1512
        %v1514 = vpop.f32.mrb[0].mxu0
        %1515 = vdwg.mxu0
        %1516 = vst.msk [vmem:[%s177 + $0xf] sm:$0x1] %vm507, %v1294
        %1517 = vst.msk [vmem:[%s177 + $0x1f] sm:$0x1] %vm507, %v1367
        %1518 = vst.msk [vmem:[%s177 + $0x2f] sm:$0x1] %vm507, %v1440
        %1519 = vst.msk [vmem:[%s177 + $0x3f] sm:$0x1] %vm507, %v1513
        %v1520 = vld [vmem:[%s153] sm:$0x3f]
        %v1521 = vld [vmem:[%s153 + $0x10] sm:$0x3f]
        %v1522 = vld [vmem:[%s153 + $0x20] sm:$0x3f]
        %v1523 = vld [vmem:[%s153 + $0x30] sm:$0x3f]
        %v1524 = vmul.f32 %v1520, 0.13619371
        %v1525 = vmul.f32 %v1521, 0.13619371
        %v1526 = vmul.f32 %v1522, 0.13619371
        %v1527 = vmul.f32 %v1523, 0.13619371
        %v1528 = vld [vmem:[%s153 + $0x1] sm:$0x3f]
        %v1529 = vld [vmem:[%s153 + $0x11] sm:$0x3f]
        %v1530 = vld [vmem:[%s153 + $0x21] sm:$0x3f]
        %v1531 = vld [vmem:[%s153 + $0x31] sm:$0x3f]
        %v1532 = vmul.f32 %v1528, 0.22824785
        %v1533 = vmul.f32 %v1529, 0.22824785
        %v1534 = vmul.f32 %v1530, 0.22824785
        %v1535 = vmul.f32 %v1531, 0.22824785
        %v1536 = vadd.f32 %v1524, %v1532
        %v1537 = vadd.f32 %v1525, %v1533
        %v1538 = vadd.f32 %v1526, %v1534
        %v1539 = vadd.f32 %v1527, %v1535
        %v1540 = vld [vmem:[%s153 + $0x2] sm:$0x3f]
        %v1541 = vld [vmem:[%s153 + $0x12] sm:$0x3f]
        %v1542 = vld [vmem:[%s153 + $0x22] sm:$0x3f]
        %v1543 = vld [vmem:[%s153 + $0x32] sm:$0x3f]
        %v1544 = vmul.f32 %v1540, 0.27111688
        %v1545 = vmul.f32 %v1541, 0.27111688
        %v1546 = vmul.f32 %v1542, 0.27111688
        %v1547 = vmul.f32 %v1543, 0.27111688
        %v1548 = vadd.f32 %v1536, %v1544
        %v1549 = vadd.f32 %v1537, %v1545
        %v1550 = vadd.f32 %v1538, %v1546
        %v1551 = vadd.f32 %v1539, %v1547
        %v1552 = vld [vmem:[%s153 + $0x3] sm:$0x3f]
        %v1553 = vld [vmem:[%s153 + $0x13] sm:$0x3f]
        %v1554 = vld [vmem:[%s153 + $0x23] sm:$0x3f]
        %v1555 = vld [vmem:[%s153 + $0x33] sm:$0x3f]
        %v1556 = vmul.f32 %v1552, 0.22824785
        %v1557 = vmul.f32 %v1553, 0.22824785
        %v1558 = vmul.f32 %v1554, 0.22824785
        %v1559 = vmul.f32 %v1555, 0.22824785
        %v1560 = vadd.f32 %v1548, %v1556
        %v1561 = vadd.f32 %v1549, %v1557
        %v1562 = vadd.f32 %v1550, %v1558
        %v1563 = vadd.f32 %v1551, %v1559
        %v1564 = vld [vmem:[%s153 + $0x4] sm:$0x3f]
        %v1565 = vld [vmem:[%s153 + $0x14] sm:$0x3f]
        %v1566 = vld [vmem:[%s153 + $0x24] sm:$0x3f]
        %v1567 = vld [vmem:[%s153 + $0x34] sm:$0x3f]
        %v1568 = vmul.f32 %v1564, 0.13619371
        %v1569 = vmul.f32 %v1565, 0.13619371
        %v1570 = vmul.f32 %v1566, 0.13619371
        %v1571 = vmul.f32 %v1567, 0.13619371
        %v1572 = vadd.f32 %v1560, %v1568
        %v1573 = vadd.f32 %v1561, %v1569
        %v1574 = vadd.f32 %v1562, %v1570
        %v1575 = vadd.f32 %v1563, %v1571
        %v1577 = vsel %vm214, %v1572, 0
        %1579 = vmatprep.subr.mxu0 0.0
        %1580 = vmatpush1.msra.mxu0 %v180
        %1581 = vmatprep.subr.mxu0 0.0
        %1582 = vmatpush1.msra.mxu0 %v181
        %1583 = vmatprep.subr.mxu0 0.0
        %1584 = vmatpush1.msra.mxu0 0.0
        %1585 = vmatprep.subr.mxu0 0.0
        %1586 = vmatpush1.msra.mxu0 0.0
        %1587 = vmatprep.subr.mxu0 0.0
        %1588 = vmatpush1.msra.mxu0 0.0
        %1589 = vmatprep.subr.mxu0 0.0
        %1590 = vmatpush1.msra.mxu0 0.0
        %1591 = vmatprep.subr.mxu0 0.0
        %1592 = vmatpush1.msra.mxu0 0.0
        %1593 = vmatprep.subr.mxu0 0.0
        %1594 = vmatpush1.msra.mxu0 0.0
        %1595 = vmatprep.subr.mxu0 0.0
        %1596 = vmatpush1.msra.mxu0 0.0
        %1597 = vmatprep.subr.mxu0 0.0
        %1598 = vmatpush1.msra.mxu0 0.0
        %1599 = vmatprep.subr.mxu0 0.0
        %1600 = vmatpush1.msra.mxu0 0.0
        %1601 = vmatprep.subr.mxu0 0.0
        %1602 = vmatpush1.msra.mxu0 0.0
        %1603 = vmatprep.subr.mxu0 0.0
        %1604 = vmatpush1.msra.mxu0 0.0
        %1605 = vmatprep.subr.mxu0 0.0
        %1606 = vmatpush1.msra.mxu0 0.0
        %1607 = vmatprep.subr.mxu0 0.0
        %1608 = vmatpush1.msra.mxu0 0.0
        %1609 = vmatprep.subr.mxu0 0.0
        %1610 = vmatpush1.msra.mxu0 0.0
        %1611 = vmatprep.subr.mxu0 0.0
        %1612 = vmatpush1.msra.mxu0 0.0
        %1613 = vmatprep.subr.mxu0 0.0
        %1614 = vmatpush1.msra.mxu0 0.0
        %1615 = vmatprep.subr.mxu0 0.0
        %1616 = vmatpush1.msra.mxu0 0.0
        %1617 = vmatprep.subr.mxu0 0.0
        %1618 = vmatpush1.msra.mxu0 0.0
        %1619 = vmatprep.subr.mxu0 0.0
        %1620 = vmatpush1.msra.mxu0 0.0
        %1621 = vmatprep.subr.mxu0 0.0
        %1622 = vmatpush1.msra.mxu0 0.0
        %1623 = vmatprep.subr.mxu0 0.0
        %1624 = vmatpush1.msra.mxu0 0.0
        %1625 = vmatprep.subr.mxu0 0.0
        %1626 = vmatpush1.msra.mxu0 0.0
        %1627 = vmatprep.subr.mxu0 0.0
        %1628 = vmatpush1.msra.mxu0 0.0
        %1629 = vmatprep.subr.mxu0 0.0
        %1630 = vmatpush1.msra.mxu0 0.0
        %1631 = vmatprep.subr.mxu0 0.0
        %1632 = vmatpush1.msra.mxu0 0.0
        %1633 = vmatprep.subr.mxu0 0.0
        %1634 = vmatpush1.msra.mxu0 0.0
        %1635 = vmatprep.subr.mxu0 0.0
        %1636 = vmatpush1.msra.mxu0 0.0
        %1637 = vmatprep.subr.mxu0 0.0
        %1638 = vmatpush1.msra.mxu0 0.0
        %1639 = vmatprep.subr.mxu0 0.0
        %1640 = vmatpush1.msra.mxu0 0.0
        %1641 = vmatprep.subr.mxu0 0.0
        %1642 = vmatpush1.msra.mxu0 0.0
        %1643 = vmatprep.mubr.f32.mxu0 0.0
        %1644 = vmatmul.mubr.f32.gmra.mrb[0].mxu0 %v1577
        %v1645 = vpop.f32.mrb[0].mxu0
        %v1646 = vadd.f32 0.0, %v1645
        %v1647 = vpop.f32.mrb[0].mxu0
        %1648 = vdwg.mxu0
        %v1650 = vsel %vm214, %v1573, 0
        %1652 = vmatprep.subr.mxu0 0.0
        %1653 = vmatpush1.msra.mxu0 %v180
        %1654 = vmatprep.subr.mxu0 0.0
        %1655 = vmatpush1.msra.mxu0 %v181
        %1656 = vmatprep.subr.mxu0 0.0
        %1657 = vmatpush1.msra.mxu0 0.0
        %1658 = vmatprep.subr.mxu0 0.0
        %1659 = vmatpush1.msra.mxu0 0.0
        %1660 = vmatprep.subr.mxu0 0.0
        %1661 = vmatpush1.msra.mxu0 0.0
        %1662 = vmatprep.subr.mxu0 0.0
        %1663 = vmatpush1.msra.mxu0 0.0
        %1664 = vmatprep.subr.mxu0 0.0
        %1665 = vmatpush1.msra.mxu0 0.0
        %1666 = vmatprep.subr.mxu0 0.0
        %1667 = vmatpush1.msra.mxu0 0.0
        %1668 = vmatprep.subr.mxu0 0.0
        %1669 = vmatpush1.msra.mxu0 0.0
        %1670 = vmatprep.subr.mxu0 0.0
        %1671 = vmatpush1.msra.mxu0 0.0
        %1672 = vmatprep.subr.mxu0 0.0
        %1673 = vmatpush1.msra.mxu0 0.0
        %1674 = vmatprep.subr.mxu0 0.0
        %1675 = vmatpush1.msra.mxu0 0.0
        %1676 = vmatprep.subr.mxu0 0.0
        %1677 = vmatpush1.msra.mxu0 0.0
        %1678 = vmatprep.subr.mxu0 0.0
        %1679 = vmatpush1.msra.mxu0 0.0
        %1680 = vmatprep.subr.mxu0 0.0
        %1681 = vmatpush1.msra.mxu0 0.0
        %1682 = vmatprep.subr.mxu0 0.0
        %1683 = vmatpush1.msra.mxu0 0.0
        %1684 = vmatprep.subr.mxu0 0.0
        %1685 = vmatpush1.msra.mxu0 0.0
        %1686 = vmatprep.subr.mxu0 0.0
        %1687 = vmatpush1.msra.mxu0 0.0
        %1688 = vmatprep.subr.mxu0 0.0
        %1689 = vmatpush1.msra.mxu0 0.0
        %1690 = vmatprep.subr.mxu0 0.0
        %1691 = vmatpush1.msra.mxu0 0.0
        %1692 = vmatprep.subr.mxu0 0.0
        %1693 = vmatpush1.msra.mxu0 0.0
        %1694 = vmatprep.subr.mxu0 0.0
        %1695 = vmatpush1.msra.mxu0 0.0
        %1696 = vmatprep.subr.mxu0 0.0
        %1697 = vmatpush1.msra.mxu0 0.0
        %1698 = vmatprep.subr.mxu0 0.0
        %1699 = vmatpush1.msra.mxu0 0.0
        %1700 = vmatprep.subr.mxu0 0.0
        %1701 = vmatpush1.msra.mxu0 0.0
        %1702 = vmatprep.subr.mxu0 0.0
        %1703 = vmatpush1.msra.mxu0 0.0
        %1704 = vmatprep.subr.mxu0 0.0
        %1705 = vmatpush1.msra.mxu0 0.0
        %1706 = vmatprep.subr.mxu0 0.0
        %1707 = vmatpush1.msra.mxu0 0.0
        %1708 = vmatprep.subr.mxu0 0.0
        %1709 = vmatpush1.msra.mxu0 0.0
        %1710 = vmatprep.subr.mxu0 0.0
        %1711 = vmatpush1.msra.mxu0 0.0
        %1712 = vmatprep.subr.mxu0 0.0
        %1713 = vmatpush1.msra.mxu0 0.0
        %1714 = vmatprep.subr.mxu0 0.0
        %1715 = vmatpush1.msra.mxu0 0.0
        %1716 = vmatprep.mubr.f32.mxu0 0.0
        %1717 = vmatmul.mubr.f32.gmra.mrb[0].mxu0 %v1650
        %v1718 = vpop.f32.mrb[0].mxu0
        %v1719 = vadd.f32 0.0, %v1718
        %v1720 = vpop.f32.mrb[0].mxu0
        %1721 = vdwg.mxu0
        %v1723 = vsel %vm214, %v1574, 0
        %1725 = vmatprep.subr.mxu0 0.0
        %1726 = vmatpush1.msra.mxu0 %v180
        %1727 = vmatprep.subr.mxu0 0.0
        %1728 = vmatpush1.msra.mxu0 %v181
        %1729 = vmatprep.subr.mxu0 0.0
        %1730 = vmatpush1.msra.mxu0 0.0
        %1731 = vmatprep.subr.mxu0 0.0
        %1732 = vmatpush1.msra.mxu0 0.0
        %1733 = vmatprep.subr.mxu0 0.0
        %1734 = vmatpush1.msra.mxu0 0.0
        %1735 = vmatprep.subr.mxu0 0.0
        %1736 = vmatpush1.msra.mxu0 0.0
        %1737 = vmatprep.subr.mxu0 0.0
        %1738 = vmatpush1.msra.mxu0 0.0
        %1739 = vmatprep.subr.mxu0 0.0
        %1740 = vmatpush1.msra.mxu0 0.0
        %1741 = vmatprep.subr.mxu0 0.0
        %1742 = vmatpush1.msra.mxu0 0.0
        %1743 = vmatprep.subr.mxu0 0.0
        %1744 = vmatpush1.msra.mxu0 0.0
        %1745 = vmatprep.subr.mxu0 0.0
        %1746 = vmatpush1.msra.mxu0 0.0
        %1747 = vmatprep.subr.mxu0 0.0
        %1748 = vmatpush1.msra.mxu0 0.0
        %1749 = vmatprep.subr.mxu0 0.0
        %1750 = vmatpush1.msra.mxu0 0.0
        %1751 = vmatprep.subr.mxu0 0.0
        %1752 = vmatpush1.msra.mxu0 0.0
        %1753 = vmatprep.subr.mxu0 0.0
        %1754 = vmatpush1.msra.mxu0 0.0
        %1755 = vmatprep.subr.mxu0 0.0
        %1756 = vmatpush1.msra.mxu0 0.0
        %1757 = vmatprep.subr.mxu0 0.0
        %1758 = vmatpush1.msra.mxu0 0.0
        %1759 = vmatprep.subr.mxu0 0.0
        %1760 = vmatpush1.msra.mxu0 0.0
        %1761 = vmatprep.subr.mxu0 0.0
        %1762 = vmatpush1.msra.mxu0 0.0
        %1763 = vmatprep.subr.mxu0 0.0
        %1764 = vmatpush1.msra.mxu0 0.0
        %1765 = vmatprep.subr.mxu0 0.0
        %1766 = vmatpush1.msra.mxu0 0.0
        %1767 = vmatprep.subr.mxu0 0.0
        %1768 = vmatpush1.msra.mxu0 0.0
        %1769 = vmatprep.subr.mxu0 0.0
        %1770 = vmatpush1.msra.mxu0 0.0
        %1771 = vmatprep.subr.mxu0 0.0
        %1772 = vmatpush1.msra.mxu0 0.0
        %1773 = vmatprep.subr.mxu0 0.0
        %1774 = vmatpush1.msra.mxu0 0.0
        %1775 = vmatprep.subr.mxu0 0.0
        %1776 = vmatpush1.msra.mxu0 0.0
        %1777 = vmatprep.subr.mxu0 0.0
        %1778 = vmatpush1.msra.mxu0 0.0
        %1779 = vmatprep.subr.mxu0 0.0
        %1780 = vmatpush1.msra.mxu0 0.0
        %1781 = vmatprep.subr.mxu0 0.0
        %1782 = vmatpush1.msra.mxu0 0.0
        %1783 = vmatprep.subr.mxu0 0.0
        %1784 = vmatpush1.msra.mxu0 0.0
        %1785 = vmatprep.subr.mxu0 0.0
        %1786 = vmatpush1.msra.mxu0 0.0
        %1787 = vmatprep.subr.mxu0 0.0
        %1788 = vmatpush1.msra.mxu0 0.0
        %1789 = vmatprep.mubr.f32.mxu0 0.0
        %1790 = vmatmul.mubr.f32.gmra.mrb[0].mxu0 %v1723
        %v1791 = vpop.f32.mrb[0].mxu0
        %v1792 = vadd.f32 0.0, %v1791
        %v1793 = vpop.f32.mrb[0].mxu0
        %1794 = vdwg.mxu0
        %v1796 = vsel %vm214, %v1575, 0
        %1798 = vmatprep.subr.mxu0 0.0
        %1799 = vmatpush1.msra.mxu0 %v180
        %1800 = vmatprep.subr.mxu0 0.0
        %1801 = vmatpush1.msra.mxu0 %v181
        %1802 = vmatprep.subr.mxu0 0.0
        %1803 = vmatpush1.msra.mxu0 0.0
        %1804 = vmatprep.subr.mxu0 0.0
        %1805 = vmatpush1.msra.mxu0 0.0
        %1806 = vmatprep.subr.mxu0 0.0
        %1807 = vmatpush1.msra.mxu0 0.0
        %1808 = vmatprep.subr.mxu0 0.0
        %1809 = vmatpush1.msra.mxu0 0.0
        %1810 = vmatprep.subr.mxu0 0.0
        %1811 = vmatpush1.msra.mxu0 0.0
        %1812 = vmatprep.subr.mxu0 0.0
        %1813 = vmatpush1.msra.mxu0 0.0
        %1814 = vmatprep.subr.mxu0 0.0
        %1815 = vmatpush1.msra.mxu0 0.0
        %1816 = vmatprep.subr.mxu0 0.0
        %1817 = vmatpush1.msra.mxu0 0.0
        %1818 = vmatprep.subr.mxu0 0.0
        %1819 = vmatpush1.msra.mxu0 0.0
        %1820 = vmatprep.subr.mxu0 0.0
        %1821 = vmatpush1.msra.mxu0 0.0
        %1822 = vmatprep.subr.mxu0 0.0
        %1823 = vmatpush1.msra.mxu0 0.0
        %1824 = vmatprep.subr.mxu0 0.0
        %1825 = vmatpush1.msra.mxu0 0.0
        %1826 = vmatprep.subr.mxu0 0.0
        %1827 = vmatpush1.msra.mxu0 0.0
        %1828 = vmatprep.subr.mxu0 0.0
        %1829 = vmatpush1.msra.mxu0 0.0
        %1830 = vmatprep.subr.mxu0 0.0
        %1831 = vmatpush1.msra.mxu0 0.0
        %1832 = vmatprep.subr.mxu0 0.0
        %1833 = vmatpush1.msra.mxu0 0.0
        %1834 = vmatprep.subr.mxu0 0.0
        %1835 = vmatpush1.msra.mxu0 0.0
        %1836 = vmatprep.subr.mxu0 0.0
        %1837 = vmatpush1.msra.mxu0 0.0
        %1838 = vmatprep.subr.mxu0 0.0
        %1839 = vmatpush1.msra.mxu0 0.0
        %1840 = vmatprep.subr.mxu0 0.0
        %1841 = vmatpush1.msra.mxu0 0.0
        %1842 = vmatprep.subr.mxu0 0.0
        %1843 = vmatpush1.msra.mxu0 0.0
        %1844 = vmatprep.subr.mxu0 0.0
        %1845 = vmatpush1.msra.mxu0 0.0
        %1846 = vmatprep.subr.mxu0 0.0
        %1847 = vmatpush1.msra.mxu0 0.0
        %1848 = vmatprep.subr.mxu0 0.0
        %1849 = vmatpush1.msra.mxu0 0.0
        %1850 = vmatprep.subr.mxu0 0.0
        %1851 = vmatpush1.msra.mxu0 0.0
        %1852 = vmatprep.subr.mxu0 0.0
        %1853 = vmatpush1.msra.mxu0 0.0
        %1854 = vmatprep.subr.mxu0 0.0
        %1855 = vmatpush1.msra.mxu0 0.0
        %1856 = vmatprep.subr.mxu0 0.0
        %1857 = vmatpush1.msra.mxu0 0.0
        %1858 = vmatprep.subr.mxu0 0.0
        %1859 = vmatpush1.msra.mxu0 0.0
        %1860 = vmatprep.subr.mxu0 0.0
        %1861 = vmatpush1.msra.mxu0 0.0
        %1862 = vmatprep.mubr.f32.mxu0 0.0
        %1863 = vmatmul.mubr.f32.gmra.mrb[0].mxu0 %v1796
        %v1864 = vpop.f32.mrb[0].mxu0
        %v1865 = vadd.f32 0.0, %v1864
        %v1866 = vpop.f32.mrb[0].mxu0
        %1867 = vdwg.mxu0
        %vm1868 = vcmask 128000
        %1869 = vst.msk [vmem:[%s177 + $0x2] sm:$0x3f] %vm1868, %v1646
        %1870 = vst.msk [vmem:[%s177 + $0x12] sm:$0x3f] %vm1868, %v1719
        %1871 = vst.msk [vmem:[%s177 + $0x22] sm:$0x3f] %vm1868, %v1792
        %1872 = vst.msk [vmem:[%s177 + $0x32] sm:$0x3f] %vm1868, %v1865
        %v1873 = vld [vmem:[%s153 + $0x6] sm:$0x3f]
        %v1874 = vld [vmem:[%s153 + $0x16] sm:$0x3f]
        %v1875 = vld [vmem:[%s153 + $0x26] sm:$0x3f]
        %v1876 = vld [vmem:[%s153 + $0x36] sm:$0x3f]
        %v1877 = vmul.f32 %v1873, 0.13619371
        %v1878 = vmul.f32 %v1874, 0.13619371
        %v1879 = vmul.f32 %v1875, 0.13619371
        %v1880 = vmul.f32 %v1876, 0.13619371
        %v1881 = vld [vmem:[%s153 + $0x7] sm:$0x3f]
        %v1882 = vld [vmem:[%s153 + $0x17] sm:$0x3f]
        %v1883 = vld [vmem:[%s153 + $0x27] sm:$0x3f]
        %v1884 = vld [vmem:[%s153 + $0x37] sm:$0x3f]
        %v1885 = vmul.f32 %v1881, 0.22824785
        %v1886 = vmul.f32 %v1882, 0.22824785
        %v1887 = vmul.f32 %v1883, 0.22824785
        %v1888 = vmul.f32 %v1884, 0.22824785
        %v1889 = vadd.f32 %v1877, %v1885
        %v1890 = vadd.f32 %v1878, %v1886
        %v1891 = vadd.f32 %v1879, %v1887
        %v1892 = vadd.f32 %v1880, %v1888
        %v1893 = vld [vmem:[%s153 + $0x8] sm:$0x3f]
        %v1894 = vld [vmem:[%s153 + $0x18] sm:$0x3f]
        %v1895 = vld [vmem:[%s153 + $0x28] sm:$0x3f]
        %v1896 = vld [vmem:[%s153 + $0x38] sm:$0x3f]
        %v1897 = vmul.f32 %v1893, 0.27111688
        %v1898 = vmul.f32 %v1894, 0.27111688
        %v1899 = vmul.f32 %v1895, 0.27111688
        %v1900 = vmul.f32 %v1896, 0.27111688
        %v1901 = vadd.f32 %v1889, %v1897
        %v1902 = vadd.f32 %v1890, %v1898
        %v1903 = vadd.f32 %v1891, %v1899
        %v1904 = vadd.f32 %v1892, %v1900
        %v1905 = vld [vmem:[%s153 + $0x9] sm:$0x3f]
        %v1906 = vld [vmem:[%s153 + $0x19] sm:$0x3f]
        %v1907 = vld [vmem:[%s153 + $0x29] sm:$0x3f]
        %v1908 = vld [vmem:[%s153 + $0x39] sm:$0x3f]
        %v1909 = vmul.f32 %v1905, 0.22824785
        %v1910 = vmul.f32 %v1906, 0.22824785
        %v1911 = vmul.f32 %v1907, 0.22824785
        %v1912 = vmul.f32 %v1908, 0.22824785
        %v1913 = vadd.f32 %v1901, %v1909
        %v1914 = vadd.f32 %v1902, %v1910
        %v1915 = vadd.f32 %v1903, %v1911
        %v1916 = vadd.f32 %v1904, %v1912
        %v1917 = vld [vmem:[%s153 + $0xa] sm:$0x3f]
        %v1918 = vld [vmem:[%s153 + $0x1a] sm:$0x3f]
        %v1919 = vld [vmem:[%s153 + $0x2a] sm:$0x3f]
        %v1920 = vld [vmem:[%s153 + $0x3a] sm:$0x3f]
        %v1921 = vmul.f32 %v1917, 0.13619371
        %v1922 = vmul.f32 %v1918, 0.13619371
        %v1923 = vmul.f32 %v1919, 0.13619371
        %v1924 = vmul.f32 %v1920, 0.13619371
        %v1925 = vadd.f32 %v1913, %v1921
        %v1926 = vadd.f32 %v1914, %v1922
        %v1927 = vadd.f32 %v1915, %v1923
        %v1928 = vadd.f32 %v1916, %v1924
        %v1930 = vsel %vm214, %v1925, 0
        %1932 = vmatprep.subr.mxu0 0.0
        %1933 = vmatpush1.msra.mxu0 %v180
        %1934 = vmatprep.subr.mxu0 0.0
        %1935 = vmatpush1.msra.mxu0 %v181
        %1936 = vmatprep.subr.mxu0 0.0
        %1937 = vmatpush1.msra.mxu0 0.0
        %1938 = vmatprep.subr.mxu0 0.0
        %1939 = vmatpush1.msra.mxu0 0.0
        %1940 = vmatprep.subr.mxu0 0.0
        %1941 = vmatpush1.msra.mxu0 0.0
        %1942 = vmatprep.subr.mxu0 0.0
        %1943 = vmatpush1.msra.mxu0 0.0
        %1944 = vmatprep.subr.mxu0 0.0
        %1945 = vmatpush1.msra.mxu0 0.0
        %1946 = vmatprep.subr.mxu0 0.0
        %1947 = vmatpush1.msra.mxu0 0.0
        %1948 = vmatprep.subr.mxu0 0.0
        %1949 = vmatpush1.msra.mxu0 0.0
        %1950 = vmatprep.subr.mxu0 0.0
        %1951 = vmatpush1.msra.mxu0 0.0
        %1952 = vmatprep.subr.mxu0 0.0
        %1953 = vmatpush1.msra.mxu0 0.0
        %1954 = vmatprep.subr.mxu0 0.0
        %1955 = vmatpush1.msra.mxu0 0.0
        %1956 = vmatprep.subr.mxu0 0.0
        %1957 = vmatpush1.msra.mxu0 0.0
        %1958 = vmatprep.subr.mxu0 0.0
        %1959 = vmatpush1.msra.mxu0 0.0
        %1960 = vmatprep.subr.mxu0 0.0
        %1961 = vmatpush1.msra.mxu0 0.0
        %1962 = vmatprep.subr.mxu0 0.0
        %1963 = vmatpush1.msra.mxu0 0.0
        %1964 = vmatprep.subr.mxu0 0.0
        %1965 = vmatpush1.msra.mxu0 0.0
        %1966 = vmatprep.subr.mxu0 0.0
        %1967 = vmatpush1.msra.mxu0 0.0
        %1968 = vmatprep.subr.mxu0 0.0
        %1969 = vmatpush1.msra.mxu0 0.0
        %1970 = vmatprep.subr.mxu0 0.0
        %1971 = vmatpush1.msra.mxu0 0.0
        %1972 = vmatprep.subr.mxu0 0.0
        %1973 = vmatpush1.msra.mxu0 0.0
        %1974 = vmatprep.subr.mxu0 0.0
        %1975 = vmatpush1.msra.mxu0 0.0
        %1976 = vmatprep.subr.mxu0 0.0
        %1977 = vmatpush1.msra.mxu0 0.0
        %1978 = vmatprep.subr.mxu0 0.0
        %1979 = vmatpush1.msra.mxu0 0.0
        %1980 = vmatprep.subr.mxu0 0.0
        %1981 = vmatpush1.msra.mxu0 0.0
        %1982 = vmatprep.subr.mxu0 0.0
        %1983 = vmatpush1.msra.mxu0 0.0
        %1984 = vmatprep.subr.mxu0 0.0
        %1985 = vmatpush1.msra.mxu0 0.0
        %1986 = vmatprep.subr.mxu0 0.0
        %1987 = vmatpush1.msra.mxu0 0.0
        %1988 = vmatprep.subr.mxu0 0.0
        %1989 = vmatpush1.msra.mxu0 0.0
        %1990 = vmatprep.subr.mxu0 0.0
        %1991 = vmatpush1.msra.mxu0 0.0
        %1992 = vmatprep.subr.mxu0 0.0
        %1993 = vmatpush1.msra.mxu0 0.0
        %1994 = vmatprep.subr.mxu0 0.0
        %1995 = vmatpush1.msra.mxu0 0.0
        %1996 = vmatprep.mubr.f32.mxu0 0.0
        %1997 = vmatmul.mubr.f32.gmra.mrb[0].mxu0 %v1930
        %v1998 = vpop.f32.mrb[0].mxu0
        %v1999 = vadd.f32 0.0, %v1998
        %v2000 = vpop.f32.mrb[0].mxu0
        %2001 = vdwg.mxu0
        %v2003 = vsel %vm214, %v1926, 0
        %2005 = vmatprep.subr.mxu0 0.0
        %2006 = vmatpush1.msra.mxu0 %v180
        %2007 = vmatprep.subr.mxu0 0.0
        %2008 = vmatpush1.msra.mxu0 %v181
        %2009 = vmatprep.subr.mxu0 0.0
        %2010 = vmatpush1.msra.mxu0 0.0
        %2011 = vmatprep.subr.mxu0 0.0
        %2012 = vmatpush1.msra.mxu0 0.0
        %2013 = vmatprep.subr.mxu0 0.0
        %2014 = vmatpush1.msra.mxu0 0.0
        %2015 = vmatprep.subr.mxu0 0.0
        %2016 = vmatpush1.msra.mxu0 0.0
        %2017 = vmatprep.subr.mxu0 0.0
        %2018 = vmatpush1.msra.mxu0 0.0
        %2019 = vmatprep.subr.mxu0 0.0
        %2020 = vmatpush1.msra.mxu0 0.0
        %2021 = vmatprep.subr.mxu0 0.0
        %2022 = vmatpush1.msra.mxu0 0.0
        %2023 = vmatprep.subr.mxu0 0.0
        %2024 = vmatpush1.msra.mxu0 0.0
        %2025 = vmatprep.subr.mxu0 0.0
        %2026 = vmatpush1.msra.mxu0 0.0
        %2027 = vmatprep.subr.mxu0 0.0
        %2028 = vmatpush1.msra.mxu0 0.0
        %2029 = vmatprep.subr.mxu0 0.0
        %2030 = vmatpush1.msra.mxu0 0.0
        %2031 = vmatprep.subr.mxu0 0.0
        %2032 = vmatpush1.msra.mxu0 0.0
        %2033 = vmatprep.subr.mxu0 0.0
        %2034 = vmatpush1.msra.mxu0 0.0
        %2035 = vmatprep.subr.mxu0 0.0
        %2036 = vmatpush1.msra.mxu0 0.0
        %2037 = vmatprep.subr.mxu0 0.0
        %2038 = vmatpush1.msra.mxu0 0.0
        %2039 = vmatprep.subr.mxu0 0.0
        %2040 = vmatpush1.msra.mxu0 0.0
        %2041 = vmatprep.subr.mxu0 0.0
        %2042 = vmatpush1.msra.mxu0 0.0
        %2043 = vmatprep.subr.mxu0 0.0
        %2044 = vmatpush1.msra.mxu0 0.0
        %2045 = vmatprep.subr.mxu0 0.0
        %2046 = vmatpush1.msra.mxu0 0.0
        %2047 = vmatprep.subr.mxu0 0.0
        %2048 = vmatpush1.msra.mxu0 0.0
        %2049 = vmatprep.subr.mxu0 0.0
        %2050 = vmatpush1.msra.mxu0 0.0
        %2051 = vmatprep.subr.mxu0 0.0
        %2052 = vmatpush1.msra.mxu0 0.0
        %2053 = vmatprep.subr.mxu0 0.0
        %2054 = vmatpush1.msra.mxu0 0.0
        %2055 = vmatprep.subr.mxu0 0.0
        %2056 = vmatpush1.msra.mxu0 0.0
        %2057 = vmatprep.subr.mxu0 0.0
        %2058 = vmatpush1.msra.mxu0 0.0
        %2059 = vmatprep.subr.mxu0 0.0
        %2060 = vmatpush1.msra.mxu0 0.0
        %2061 = vmatprep.subr.mxu0 0.0
        %2062 = vmatpush1.msra.mxu0 0.0
        %2063 = vmatprep.subr.mxu0 0.0
        %2064 = vmatpush1.msra.mxu0 0.0
        %2065 = vmatprep.subr.mxu0 0.0
        %2066 = vmatpush1.msra.mxu0 0.0
        %2067 = vmatprep.subr.mxu0 0.0
        %2068 = vmatpush1.msra.mxu0 0.0
        %2069 = vmatprep.mubr.f32.mxu0 0.0
        %2070 = vmatmul.mubr.f32.gmra.mrb[0].mxu0 %v2003
        %v2071 = vpop.f32.mrb[0].mxu0
        %v2072 = vadd.f32 0.0, %v2071
        %v2073 = vpop.f32.mrb[0].mxu0
        %2074 = vdwg.mxu0
        %v2076 = vsel %vm214, %v1927, 0
        %2078 = vmatprep.subr.mxu0 0.0
        %2079 = vmatpush1.msra.mxu0 %v180
        %2080 = vmatprep.subr.mxu0 0.0
        %2081 = vmatpush1.msra.mxu0 %v181
        %2082 = vmatprep.subr.mxu0 0.0
        %2083 = vmatpush1.msra.mxu0 0.0
        %2084 = vmatprep.subr.mxu0 0.0
        %2085 = vmatpush1.msra.mxu0 0.0
        %2086 = vmatprep.subr.mxu0 0.0
        %2087 = vmatpush1.msra.mxu0 0.0
        %2088 = vmatprep.subr.mxu0 0.0
        %2089 = vmatpush1.msra.mxu0 0.0
        %2090 = vmatprep.subr.mxu0 0.0
        %2091 = vmatpush1.msra.mxu0 0.0
        %2092 = vmatprep.subr.mxu0 0.0
        %2093 = vmatpush1.msra.mxu0 0.0
        %2094 = vmatprep.subr.mxu0 0.0
        %2095 = vmatpush1.msra.mxu0 0.0
        %2096 = vmatprep.subr.mxu0 0.0
        %2097 = vmatpush1.msra.mxu0 0.0
        %2098 = vmatprep.subr.mxu0 0.0
        %2099 = vmatpush1.msra.mxu0 0.0
        %2100 = vmatprep.subr.mxu0 0.0
        %2101 = vmatpush1.msra.mxu0 0.0
        %2102 = vmatprep.subr.mxu0 0.0
        %2103 = vmatpush1.msra.mxu0 0.0
        %2104 = vmatprep.subr.mxu0 0.0
        %2105 = vmatpush1.msra.mxu0 0.0
        %2106 = vmatprep.subr.mxu0 0.0
        %2107 = vmatpush1.msra.mxu0 0.0
        %2108 = vmatprep.subr.mxu0 0.0
        %2109 = vmatpush1.msra.mxu0 0.0
        %2110 = vmatprep.subr.mxu0 0.0
        %2111 = vmatpush1.msra.mxu0 0.0
        %2112 = vmatprep.subr.mxu0 0.0
        %2113 = vmatpush1.msra.mxu0 0.0
        %2114 = vmatprep.subr.mxu0 0.0
        %2115 = vmatpush1.msra.mxu0 0.0
        %2116 = vmatprep.subr.mxu0 0.0
        %2117 = vmatpush1.msra.mxu0 0.0
        %2118 = vmatprep.subr.mxu0 0.0
        %2119 = vmatpush1.msra.mxu0 0.0
        %2120 = vmatprep.subr.mxu0 0.0
        %2121 = vmatpush1.msra.mxu0 0.0
        %2122 = vmatprep.subr.mxu0 0.0
        %2123 = vmatpush1.msra.mxu0 0.0
        %2124 = vmatprep.subr.mxu0 0.0
        %2125 = vmatpush1.msra.mxu0 0.0
        %2126 = vmatprep.subr.mxu0 0.0
        %2127 = vmatpush1.msra.mxu0 0.0
        %2128 = vmatprep.subr.mxu0 0.0
        %2129 = vmatpush1.msra.mxu0 0.0
        %2130 = vmatprep.subr.mxu0 0.0
        %2131 = vmatpush1.msra.mxu0 0.0
        %2132 = vmatprep.subr.mxu0 0.0
        %2133 = vmatpush1.msra.mxu0 0.0
        %2134 = vmatprep.subr.mxu0 0.0
        %2135 = vmatpush1.msra.mxu0 0.0
        %2136 = vmatprep.subr.mxu0 0.0
        %2137 = vmatpush1.msra.mxu0 0.0
        %2138 = vmatprep.subr.mxu0 0.0
        %2139 = vmatpush1.msra.mxu0 0.0
        %2140 = vmatprep.subr.mxu0 0.0
        %2141 = vmatpush1.msra.mxu0 0.0
        %2142 = vmatprep.mubr.f32.mxu0 0.0
        %2143 = vmatmul.mubr.f32.gmra.mrb[0].mxu0 %v2076
        %v2144 = vpop.f32.mrb[0].mxu0
        %v2145 = vadd.f32 0.0, %v2144
        %v2146 = vpop.f32.mrb[0].mxu0
        %2147 = vdwg.mxu0
        %v2149 = vsel %vm214, %v1928, 0
        %2151 = vmatprep.subr.mxu0 0.0
        %2152 = vmatpush1.msra.mxu0 %v180
        %2153 = vmatprep.subr.mxu0 0.0
        %2154 = vmatpush1.msra.mxu0 %v181
        %2155 = vmatprep.subr.mxu0 0.0
        %2156 = vmatpush1.msra.mxu0 0.0
        %2157 = vmatprep.subr.mxu0 0.0
        %2158 = vmatpush1.msra.mxu0 0.0
        %2159 = vmatprep.subr.mxu0 0.0
        %2160 = vmatpush1.msra.mxu0 0.0
        %2161 = vmatprep.subr.mxu0 0.0
        %2162 = vmatpush1.msra.mxu0 0.0
        %2163 = vmatprep.subr.mxu0 0.0
        %2164 = vmatpush1.msra.mxu0 0.0
        %2165 = vmatprep.subr.mxu0 0.0
        %2166 = vmatpush1.msra.mxu0 0.0
        %2167 = vmatprep.subr.mxu0 0.0
        %2168 = vmatpush1.msra.mxu0 0.0
        %2169 = vmatprep.subr.mxu0 0.0
        %2170 = vmatpush1.msra.mxu0 0.0
        %2171 = vmatprep.subr.mxu0 0.0
        %2172 = vmatpush1.msra.mxu0 0.0
        %2173 = vmatprep.subr.mxu0 0.0
        %2174 = vmatpush1.msra.mxu0 0.0
        %2175 = vmatprep.subr.mxu0 0.0
        %2176 = vmatpush1.msra.mxu0 0.0
        %2177 = vmatprep.subr.mxu0 0.0
        %2178 = vmatpush1.msra.mxu0 0.0
        %2179 = vmatprep.subr.mxu0 0.0
        %2180 = vmatpush1.msra.mxu0 0.0
        %2181 = vmatprep.subr.mxu0 0.0
        %2182 = vmatpush1.msra.mxu0 0.0
        %2183 = vmatprep.subr.mxu0 0.0
        %2184 = vmatpush1.msra.mxu0 0.0
        %2185 = vmatprep.subr.mxu0 0.0
        %2186 = vmatpush1.msra.mxu0 0.0
        %2187 = vmatprep.subr.mxu0 0.0
        %2188 = vmatpush1.msra.mxu0 0.0
        %2189 = vmatprep.subr.mxu0 0.0
        %2190 = vmatpush1.msra.mxu0 0.0
        %2191 = vmatprep.subr.mxu0 0.0
        %2192 = vmatpush1.msra.mxu0 0.0
        %2193 = vmatprep.subr.mxu0 0.0
        %2194 = vmatpush1.msra.mxu0 0.0
        %2195 = vmatprep.subr.mxu0 0.0
        %2196 = vmatpush1.msra.mxu0 0.0
        %2197 = vmatprep.subr.mxu0 0.0
        %2198 = vmatpush1.msra.mxu0 0.0
        %2199 = vmatprep.subr.mxu0 0.0
        %2200 = vmatpush1.msra.mxu0 0.0
        %2201 = vmatprep.subr.mxu0 0.0
        %2202 = vmatpush1.msra.mxu0 0.0
        %2203 = vmatprep.subr.mxu0 0.0
        %2204 = vmatpush1.msra.mxu0 0.0
        %2205 = vmatprep.subr.mxu0 0.0
        %2206 = vmatpush1.msra.mxu0 0.0
        %2207 = vmatprep.subr.mxu0 0.0
        %2208 = vmatpush1.msra.mxu0 0.0
        %2209 = vmatprep.subr.mxu0 0.0
        %2210 = vmatpush1.msra.mxu0 0.0
        %2211 = vmatprep.subr.mxu0 0.0
        %2212 = vmatpush1.msra.mxu0 0.0
        %2213 = vmatprep.subr.mxu0 0.0
        %2214 = vmatpush1.msra.mxu0 0.0
        %2215 = vmatprep.mubr.f32.mxu0 0.0
        %2216 = vmatmul.mubr.f32.gmra.mrb[0].mxu0 %v2149
        %v2217 = vpop.f32.mrb[0].mxu0
        %v2218 = vadd.f32 0.0, %v2217
        %v2219 = vpop.f32.mrb[0].mxu0
        %2220 = vdwg.mxu0
        %2221 = vst.msk [vmem:[%s177 + $0x8] sm:$0x3f] %vm1868, %v1999
        %2222 = vst.msk [vmem:[%s177 + $0x18] sm:$0x3f] %vm1868, %v2072
        %2223 = vst.msk [vmem:[%s177 + $0x28] sm:$0x3f] %vm1868, %v2145
        %2224 = vst.msk [vmem:[%s177 + $0x38] sm:$0x3f] %vm1868, %v2218
        %s2225 = sand.u32 %s75, 1
        %s2226 = scalar_lea.sflag [#allocation4], %s2225
        %s2227 = sand.u32 %s75, 1
        %s2228 = smul.addr %s2227, 64
        %s2229 = scalar_lea.vmem [#allocation7], %s2228
        // Predicated region
        $region37: #{tpu_custom_call.1} parent=27 // pred_check
          %p2230 = pneg %p85
        $region38: #{tpu_custom_call.1} parent=27 // pred_check_branch
          %2232 = sbr.rel (%p2230) target = $region40
        $region39: #{tpu_custom_call.1} parent=27 // pred_region
          %s2233 = smul.u32 4, %s20
          %s2235 = ssub.s32 1024, 1024
          %2236 = vsyncadd %s2226, %s2235
          %s2237 = smul.addr %s2233, 2
          %s2238 = smul.addr %s2237, 128
          %s2239 = scalar_lea.hbm %s2, %s2238
          %s2240 = sshll.u32 %s2229, 4
          %s2241 = int_to_ptr.vmem [resolvable:$true] %s2240
          %2246 = dma.vmem_to_hbm [thread:$0]  %s2241, 1024, %s2239, %s2226, 128, 128, 8
        $region40: #{tpu_custom_call.1} parent=27 // pred_fallthru
          _
      $region28: #{tpu_custom_call.1} parent=5 // pred_fallthru
        _
      %p2247 = scmp.le.s32.totalorder 2, %s15
      // Predicated region
      $region41: #{tpu_custom_call.1} parent=5 // pred_check
        %p2248 = pneg %p2247
      $region42: #{tpu_custom_call.1} parent=5 // pred_check_branch
        %2250 = sbr.rel (%p2248) target = $region44
      $region43: #{tpu_custom_call.1} parent=5 // pred_region
        %s2251 = ssub.s32 %s15, 2
        // Predicated region
        $region45: #{tpu_custom_call.1} parent=43 // pred_check
          %p2252 = pneg %p91
        $region46: #{tpu_custom_call.1} parent=43 // pred_check_branch
          %2254 = sbr.rel (%p2252) target = $region48
        $region47: #{tpu_custom_call.1} parent=43 // pred_region
          %s2255 = sand.u32 %s76, 1
          %s2256 = scalar_lea.sflag [#allocation4], %s2255
          %s2257 = sand.u32 %s76, 1
          %s2258 = smul.addr %s2257, 64
          %s2259 = scalar_lea.vmem [#allocation7], %s2258
          %2260 = dma.done %s2256, 1024
        $region48: #{tpu_custom_call.1} parent=43 // pred_fallthru
          _
      $region44: #{tpu_custom_call.1} parent=5 // pred_fallthru
        _
    $region6: #{tpu_custom_call.1} parent=1 // loop_footer
      %s19 = sadd.s32 1, %s15
    $region7: #{tpu_custom_call.1} parent=1 // loop_footer_branch
      %14 = sbr.rel target = $region3
    $region8: #{tpu_custom_call.1} parent=1 // loop_exit
      _
    %2261 = vsyncpa [#allocation3], 1
    %s2262 = scalar_lea.sflag [#allocation3], 1
    %2263 = vsyncpa %s2262, 1
    %2264 = vsyncpa [#allocation6], 1
    %2265 = vsyncpa [#allocation4], 1
    %s2266 = scalar_lea.sflag [#allocation4], 1
    %2267 = vsyncpa %s2266, 1

</llo_original>
